<compile_context>
chip_gen: v7x
topology: tpu7x:2x2x1
jax: 0.10.0
libtpu: 0.0.40
codegen_flags: <defaults>
</compile_context>

<pallas_src>
import math

import numpy as np
import jax
import jax.numpy as jnp
from jax.experimental import pallas as pl
from jax.experimental.pallas import tpu as pltpu


# ------------------------------ in-kernel helpers ---------------------------

def _conv3x3_cmajor(x, wcat, bcol, Wp, relu):
    """3x3 conv (padding=1) on a channel-major, padded-flat activation.

    x:    (Cin, n) with n = (H+2)*(W+2); border positions must be zero.
    wcat: (Cout, 9*Cin) -- HWIO weight reshaped so K index = (kh*3+kw)*Cin+ci.
    bcol: (Cout, 1).
    Returns (Cout, n) in the same padded coordinates; border lanes hold
    garbage and are masked / ignored by the consumer.
    """
    cin, n = x.shape
    m = Wp + 1
    z = jnp.zeros((cin, m), jnp.float32)
    xw = jnp.concatenate([z, x, z], axis=1)               # (Cin, n + 2m)
    taps = []
    for kh in range(3):
        for kw in range(3):
            off = (kh - 1) * Wp + (kw - 1)                # in [-m, m]
            taps.append(xw[:, m + off:m + off + n])       # lane-shifted window
    xstack = jnp.concatenate(taps, axis=0)                # (9*Cin, n)
    acc = jnp.dot(wcat, xstack, preferred_element_type=jnp.float32) + bcol
    if relu:
        acc = jnp.maximum(acc, 0.0)
    return acc


def _pool4max(y, Wp):
    """Shifted 4-way max: the 2x2 max of pooled pixel (i, j) lands on lane
    (2i+1)*Wp + (2j+1) of the pre-pool padded grid.  Selecting those lanes is
    done later with a 0/1 matmul (or folded into the first Linear weight)."""
    c, n = y.shape
    m = Wp + 1
    z = jnp.zeros((c, m), jnp.float32)
    yw = jnp.concatenate([y, z], axis=1)
    p00 = yw[:, 0:n]
    p01 = yw[:, 1:1 + n]
    p10 = yw[:, Wp:Wp + n]
    p11 = yw[:, m:m + n]
    return jnp.maximum(jnp.maximum(p00, p01), jnp.maximum(p10, p11))


def _make_kernel(plan, a1_slot, b1_slot, lin_plan):
    """Fused forward kernel: refs = (x, *params, out)."""
    def kernel(*refs):
        out_ref = refs[-1]
        act = refs[0][0]                                  # (C0, n0), zero border
        for st in plan:
            if st["kind"] == "conv":
                act = _conv3x3_cmajor(act, refs[st["w_slot"]][...],
                                      refs[st["b_slot"]][...],
                                      st["Wp"], st["relu"])
                if st["mask_slot"] is not None:           # next op is a conv:
                    act = act * refs[st["mask_slot"]][...]  # re-zero the border
            else:                                         # maxpool 2x2
                act = _pool4max(act, st["Wp"])
                if st["sel_slot"] is not None:            # intermediate pool
                    act = jnp.dot(act, refs[st["sel_slot"]][...],
                                  preferred_element_type=jnp.float32)
        # NCHW flatten == lane-concat of channel rows in this layout; the
        # selection of valid lanes is folded into the first Linear weight A1.
        c_last = act.shape[0]
        feat = jnp.concatenate([act[c:c + 1, :] for c in range(c_last)], axis=1)
        h = jnp.dot(feat, refs[a1_slot][...],
                    preferred_element_type=jnp.float32) + refs[b1_slot][...]
        h = jnp.maximum(h, 0.0)                           # first hidden Linear+ReLU
        for w_slot, b_slot, relu in lin_plan:
            h = jnp.dot(h, refs[w_slot][...],
                        preferred_element_type=jnp.float32) + refs[b_slot][...]
            if relu:
                h = jnp.maximum(h, 0.0)
        out_ref[0] = h
    return kernel


# ------------------------------ model builder -------------------------------

def build_conv_classifier(key, in_size, out_classes, channels, pool_every,
                          hidden_dims, batch):
    C0, H, W = in_size
    P = pool_every
    N = len(channels)
    quotient = int(N / P)
    # NOTE: replicates the original module's (quirky) remainder formula.
    reminder = int(math.fabs(math.remainder(N, P)))
    n_convs = quotient * P + reminder

    # ---- feature-extractor op sequence (mirrors the PyTorch Sequential) ----
    ops = []
    k = 0
    for _ in range(quotient):
        for _ in range(P):
            ops.append(("conv", k, True)); k += 1
        ops.append(("pool",))
    for _ in range(reminder):
        ops.append(("conv", k, False)); k += 1            # remainder convs: no ReLU

    # ---- raw params (PyTorch default init: U(+-1/sqrt(fan_in))) ----
    conv_w, conv_b = [], []
    cin = C0
    for i in range(n_convs):
        cout = channels[i]
        key, k1, k2 = jax.random.split(key, 3)
        bound = 1.0 / math.sqrt(cin * 9)
        conv_w.append(jax.random.uniform(k1, (3, 3, cin, cout), jnp.float32, -bound, bound))
        conv_b.append(jax.random.uniform(k2, (cout,), jnp.float32, -bound, bound))
        cin = cout
    C_last = cin

    # ---- spatial walk / per-step geometry ----
    plan = []
    h, w = H, W
    for idx, op in enumerate(ops):
        if op[0] == "conv":
            nxt_is_conv = idx + 1 < len(ops) and ops[idx + 1][0] == "conv"
            plan.append(dict(kind="conv", conv_idx=op[1], relu=op[2],
                             Hp=h + 2, Wp=w + 2, need_mask=nxt_is_conv))
        else:
            plan.append(dict(kind="pool", H=h, W=w, Hp=h + 2, Wp=w + 2,
                             is_last=(idx == len(ops) - 1)))
            h, w = h // 2, w // 2
    Hf, Wf = h, w
    flat = (int(W / 2 ** quotient) * int(H / 2 ** quotient)
            * channels[P * quotient + reminder - 1])
    assert flat == C_last * Hf * Wf, "module flatten size mismatch"

    dims = [flat] + list(hidden_dims) + [out_classes]
    lin_w, lin_b = [], []
    for i in range(len(dims) - 1):
        key, k1, k2 = jax.random.split(key, 3)
        bound = 1.0 / math.sqrt(dims[i])
        lin_w.append(jax.random.uniform(k1, (dims[i], dims[i + 1]), jnp.float32, -bound, bound))
        lin_b.append(jax.random.uniform(k2, (dims[i + 1],), jnp.float32, -bound, bound))

    # ---- kernel-layout operands (all VMEM-resident across grid steps) ----
    extra = []
    def add(arr):
        extra.append(jnp.asarray(arr, jnp.float32))
        return len(extra)                                 # index into kernel refs

    def interior_mask(Hp, Wp):
        msk = np.zeros((Hp, Wp), np.float32)
        msk[1:-1, 1:-1] = 1.0
        return msk.reshape(1, Hp * Wp)

    def pool_select(Hi, Wi):
        """0/1 (n_pre, n_post): pick the pooled value at lane (2i+1)*Wp+(2j+1)
        and place it at the interior of the post-pool padded grid (border 0)."""
        Wp = Wi + 2
        H2, W2 = Hi // 2, Wi // 2
        Hp2, Wp2 = H2 + 2, W2 + 2
        S = np.zeros(((Hi + 2) * Wp, Hp2 * Wp2), np.float32)
        for i in range(H2):
            for j in range(W2):
                S[(2 * i + 1) * Wp + (2 * j + 1), (i + 1) * Wp2 + (j + 1)] = 1.0
        return S

    for st in plan:
        if st["kind"] == "conv":
            kc = st["conv_idx"]
            ci, co = conv_w[kc].shape[2], conv_w[kc].shape[3]
            st["w_slot"] = add(jnp.reshape(conv_w[kc], (9 * ci, co)).T)   # (Cout, 9*Cin)
            st["b_slot"] = add(jnp.reshape(conv_b[kc], (co, 1)))
            st["mask_slot"] = add(interior_mask(st["Hp"], st["Wp"])) if st["need_mask"] else None
        else:
            st["sel_slot"] = None if st["is_last"] else add(pool_select(st["H"], st["W"]))

    # Fold "select valid lanes + NCHW flatten" into the first Linear weight.
    last = plan[-1]
    if last["kind"] == "pool":
        n_last, Wp_last = last["Hp"] * last["Wp"], last["Wp"]
        def q_of(i, j): return (2 * i + 1) * Wp_last + (2 * j + 1)
    else:
        Wp_last = Wf + 2
        n_last = (Hf + 2) * Wp_last
        def q_of(i, j): return (i + 1) * Wp_last + (j + 1)
    W1 = np.asarray(lin_w[0])                             # (flat, hidden0)
    A1 = np.zeros((C_last * n_last, W1.shape[1]), np.float32)
    for c in range(C_last):
        for i in range(Hf):
            for j in range(Wf):
                A1[c * n_last + q_of(i, j), :] = W1[c * Hf * Wf + i * Wf + j, :]
    a1_slot = add(A1)
    b1_slot = add(jnp.reshape(lin_b[0], (1, -1)))
    lin_plan = []
    for i in range(1, len(lin_w)):
        w_slot = add(lin_w[i])
        b_slot = add(jnp.reshape(lin_b[i], (1, -1)))
        lin_plan.append((w_slot, b_slot, i < len(lin_w) - 1))

    # ---- the single fused pallas_call ----
    n0 = (H + 2) * (W + 2)
    kernel = _make_kernel(plan, a1_slot, b1_slot, lin_plan)
    in_specs = [pl.BlockSpec((1, C0, n0), lambda b: (b, 0, 0))]
    in_specs += [pl.BlockSpec(arr.shape, lambda b: (0, 0)) for arr in extra]
    fused = pl.pallas_call(
        kernel,
        out_shape=jax.ShapeDtypeStruct((batch, 1, out_classes), jnp.float32),
        grid=(batch,),
        in_specs=in_specs,
        out_specs=pl.BlockSpec((1, 1, out_classes), lambda b: (b, 0, 0)),
        compiler_params=pltpu.CompilerParams(dimension_semantics=("parallel",)),
    )
    extra_t = tuple(extra)

    @jax.jit
    def forward(x_nchw):
        # Boundary layout plumbing only (tiny, one-time): NCHW input ->
        # zero-padded, spatially-flattened, channel-major kernel layout.
        xp = jnp.pad(x_nchw.astype(jnp.float32), ((0, 0), (0, 0), (1, 1), (1, 1)))
        out = fused(xp.reshape(batch, C0, n0), *extra_t)
        return out.reshape(batch, out_classes)

    raw = dict(ops=ops, conv_w=conv_w, conv_b=conv_b, lin_w=lin_w, lin_b=lin_b)
    return forward, raw


# ------------------------------ XLA reference -------------------------------

def reference_forward(x_nchw, raw):
    a = x_nchw.astype(jnp.float32)
    for op in raw["ops"]:
        if op[0] == "conv":
            kc, relu = op[1], op[2]
            a = jax.lax.conv_general_dilated(
                a, raw["conv_w"][kc], window_strides=(1, 1),
                padding=((1, 1), (1, 1)),
                dimension_numbers=("NCHW", "HWIO", "NCHW"))
            a = a + raw["conv_b"][kc].reshape(1, -1, 1, 1)
            if relu:
                a = jnp.maximum(a, 0.0)
        else:
            a = jax.lax.reduce_window(a, -jnp.inf, jax.lax.max,
                                      (1, 1, 2, 2), (1, 1, 2, 2), "VALID")
    feats = a.reshape(a.shape[0], -1)
    n_lin = len(raw["lin_w"])
    for i in range(n_lin):
        feats = feats @ raw["lin_w"][i] + raw["lin_b"][i]
        if i < n_lin - 1:
            feats = jnp.maximum(feats, 0.0)
    return feats


# ----------------------------------- main -----------------------------------

if __name__ == "__main__":
    # ConvClassifier(in_size=(4,16,16), out_classes=10, channels=[8,8],
    #                pool_every=2, hidden_dims=[32]) on a batch of 2.
    in_size = (4, 16, 16)
    out_classes = 10
    channels = [8, 8]
    pool_every = 2
    hidden_dims = [32]
    batch = 2

    key = jax.random.PRNGKey(0)
    key, xk = jax.random.split(key)
    x = jax.random.normal(xk, (batch,) + in_size, jnp.float32)

    forward, raw = build_conv_classifier(key, in_size, out_classes, channels,
                                         pool_every, hidden_dims, batch)

    out = jax.block_until_ready(forward(x))
    assert out.shape == (batch, out_classes), out.shape
    assert bool(jnp.all(jnp.isfinite(out)))

    # correctness check against a plain-XLA reference of the same module
    ref = jax.block_until_ready(reference_forward(x, raw))
    err = float(jnp.max(jnp.abs(out - ref)))
    assert err < 5e-2, f"mismatch vs XLA reference: max abs err = {err}"

    print("KERNEL_OK")
</pallas_src>

<mosaic_0001>
module attributes {stable_mosaic.version = 11 : i64} {
  func.func @kernel(%arg0: i32, %arg1: memref<1x4x324xf32, #tpu.memory_space<vmem>>, %arg2: memref<8x36xf32, #tpu.memory_space<vmem>>, %arg3: memref<8x1xf32, #tpu.memory_space<vmem>>, %arg4: memref<1x324xf32, #tpu.memory_space<vmem>>, %arg5: memref<8x72xf32, #tpu.memory_space<vmem>>, %arg6: memref<8x1xf32, #tpu.memory_space<vmem>>, %arg7: memref<2592x32xf32, #tpu.memory_space<vmem>>, %arg8: memref<1x32xf32, #tpu.memory_space<vmem>>, %arg9: memref<32x10xf32, #tpu.memory_space<vmem>>, %arg10: memref<1x10xf32, #tpu.memory_space<vmem>>, %arg11: memref<1x1x10xf32, #tpu.memory_space<vmem>>) attributes {dimension_semantics = [#tpu.dimension_semantics<parallel>], iteration_bounds = array<i64: 2>, scalar_prefetch = 0 : i64, scratch_operands = 0 : i64, tpu.core_type = #tpu.core_type<tc>, window_params = [{transform_indices = @transform_0, window_bounds = array<i64: 1, 4, 324>}, {pipeline_mode = #tpu.pipeline_mode<synchronous>, transform_indices = @transform_1, window_bounds = array<i64: 8, 36>}, {pipeline_mode = #tpu.pipeline_mode<synchronous>, transform_indices = @transform_2, window_bounds = array<i64: 8, 1>}, {pipeline_mode = #tpu.pipeline_mode<synchronous>, transform_indices = @transform_3, window_bounds = array<i64: 1, 324>}, {pipeline_mode = #tpu.pipeline_mode<synchronous>, transform_indices = @transform_4, window_bounds = array<i64: 8, 72>}, {pipeline_mode = #tpu.pipeline_mode<synchronous>, transform_indices = @transform_5, window_bounds = array<i64: 8, 1>}, {pipeline_mode = #tpu.pipeline_mode<synchronous>, transform_indices = @transform_6, window_bounds = array<i64: 2592, 32>}, {pipeline_mode = #tpu.pipeline_mode<synchronous>, transform_indices = @transform_7, window_bounds = array<i64: 1, 32>}, {pipeline_mode = #tpu.pipeline_mode<synchronous>, transform_indices = @transform_8, window_bounds = array<i64: 32, 10>}, {pipeline_mode = #tpu.pipeline_mode<synchronous>, transform_indices = @transform_9, window_bounds = array<i64: 1, 10>}, {transform_indices = @transform_10, window_bounds = array<i64: 1, 1, 10>}]} {
    %c0 = arith.constant 0 : index
    %c0_0 = arith.constant 0 : index
    %c0_1 = arith.constant 0 : index
    %0 = vector.load %arg1[%c0, %c0_0, %c0_1] : memref<1x4x324xf32, #tpu.memory_space<vmem>>, vector<1x4x324xf32>
    %1 = vector.shape_cast %0 : vector<1x4x324xf32> to vector<4x324xf32>
    %c0_2 = arith.constant 0 : index
    %c0_3 = arith.constant 0 : index
    %2 = vector.load %arg2[%c0_2, %c0_3] : memref<8x36xf32, #tpu.memory_space<vmem>>, vector<8x36xf32>
    %c0_4 = arith.constant 0 : index
    %c0_5 = arith.constant 0 : index
    %3 = vector.load %arg3[%c0_4, %c0_5] : memref<8x1xf32, #tpu.memory_space<vmem>>, vector<8x1xf32>
    %cst = arith.constant 0.000000e+00 : f32
    %4 = vector.broadcast %cst : f32 to vector<4x19xf32>
    %5 = tpu.concatenate %4, %1, %4 in 1 : vector<4x19xf32>, vector<4x324xf32>, vector<4x19xf32> -> vector<4x362xf32>
    %6 = vector.extract_strided_slice %5 {offsets = [0, 0], sizes = [4, 324], strides = [1, 1]} : vector<4x362xf32> to vector<4x324xf32>
    %7 = vector.extract_strided_slice %5 {offsets = [0, 1], sizes = [4, 324], strides = [1, 1]} : vector<4x362xf32> to vector<4x324xf32>
    %8 = vector.extract_strided_slice %5 {offsets = [0, 2], sizes = [4, 324], strides = [1, 1]} : vector<4x362xf32> to vector<4x324xf32>
    %9 = vector.extract_strided_slice %5 {offsets = [0, 18], sizes = [4, 324], strides = [1, 1]} : vector<4x362xf32> to vector<4x324xf32>
    %10 = vector.extract_strided_slice %5 {offsets = [0, 19], sizes = [4, 324], strides = [1, 1]} : vector<4x362xf32> to vector<4x324xf32>
    %11 = vector.extract_strided_slice %5 {offsets = [0, 20], sizes = [4, 324], strides = [1, 1]} : vector<4x362xf32> to vector<4x324xf32>
    %12 = vector.extract_strided_slice %5 {offsets = [0, 36], sizes = [4, 324], strides = [1, 1]} : vector<4x362xf32> to vector<4x324xf32>
    %13 = vector.extract_strided_slice %5 {offsets = [0, 37], sizes = [4, 324], strides = [1, 1]} : vector<4x362xf32> to vector<4x324xf32>
    %14 = vector.extract_strided_slice %5 {offsets = [0, 38], sizes = [4, 324], strides = [1, 1]} : vector<4x362xf32> to vector<4x324xf32>
    %15 = tpu.concatenate %6, %7, %8, %9, %10, %11, %12, %13, %14 in 0 : vector<4x324xf32>, vector<4x324xf32>, vector<4x324xf32>, vector<4x324xf32>, vector<4x324xf32>, vector<4x324xf32>, vector<4x324xf32>, vector<4x324xf32>, vector<4x324xf32> -> vector<36x324xf32>
    %cst_6 = arith.constant dense<0.000000e+00> : vector<8x324xf32>
    %16 = tpu.matmul %2, %15, %cst_6 {dimension_numbers = #tpu.dot_dimension_numbers<[1], [0], [0], [1], [0, 0, 1, 1], [], []>} : vector<8x36xf32>, vector<36x324xf32>, vector<8x324xf32> -> vector<8x324xf32>
    %17 = vector.broadcast %3 : vector<8x1xf32> to vector<8x324xf32>
    %18 = arith.addf %16, %17 : vector<8x324xf32>
    %cst_7 = arith.constant 0.000000e+00 : f32
    %19 = vector.broadcast %cst_7 : f32 to vector<8x324xf32>
    %20 = arith.maximumf %18, %19 : vector<8x324xf32>
    %c0_8 = arith.constant 0 : index
    %c0_9 = arith.constant 0 : index
    %21 = vector.load %arg4[%c0_8, %c0_9] : memref<1x324xf32, #tpu.memory_space<vmem>>, vector<1x324xf32>
    %22 = vector.broadcast %21 : vector<1x324xf32> to vector<8x324xf32>
    %23 = arith.mulf %20, %22 : vector<8x324xf32>
    %c0_10 = arith.constant 0 : index
    %c0_11 = arith.constant 0 : index
    %24 = vector.load %arg5[%c0_10, %c0_11] : memref<8x72xf32, #tpu.memory_space<vmem>>, vector<8x72xf32>
    %c0_12 = arith.constant 0 : index
    %c0_13 = arith.constant 0 : index
    %25 = vector.load %arg6[%c0_12, %c0_13] : memref<8x1xf32, #tpu.memory_space<vmem>>, vector<8x1xf32>
    %cst_14 = arith.constant 0.000000e+00 : f32
    %26 = vector.broadcast %cst_14 : f32 to vector<8x19xf32>
    %27 = tpu.concatenate %26, %23, %26 in 1 : vector<8x19xf32>, vector<8x324xf32>, vector<8x19xf32> -> vector<8x362xf32>
    %28 = vector.extract_strided_slice %27 {offsets = [0, 0], sizes = [8, 324], strides = [1, 1]} : vector<8x362xf32> to vector<8x324xf32>
    %29 = vector.extract_strided_slice %27 {offsets = [0, 1], sizes = [8, 324], strides = [1, 1]} : vector<8x362xf32> to vector<8x324xf32>
    %30 = vector.extract_strided_slice %27 {offsets = [0, 2], sizes = [8, 324], strides = [1, 1]} : vector<8x362xf32> to vector<8x324xf32>
    %31 = vector.extract_strided_slice %27 {offsets = [0, 18], sizes = [8, 324], strides = [1, 1]} : vector<8x362xf32> to vector<8x324xf32>
    %32 = vector.extract_strided_slice %27 {offsets = [0, 19], sizes = [8, 324], strides = [1, 1]} : vector<8x362xf32> to vector<8x324xf32>
    %33 = vector.extract_strided_slice %27 {offsets = [0, 20], sizes = [8, 324], strides = [1, 1]} : vector<8x362xf32> to vector<8x324xf32>
    %34 = vector.extract_strided_slice %27 {offsets = [0, 36], sizes = [8, 324], strides = [1, 1]} : vector<8x362xf32> to vector<8x324xf32>
    %35 = vector.extract_strided_slice %27 {offsets = [0, 37], sizes = [8, 324], strides = [1, 1]} : vector<8x362xf32> to vector<8x324xf32>
    %36 = vector.extract_strided_slice %27 {offsets = [0, 38], sizes = [8, 324], strides = [1, 1]} : vector<8x362xf32> to vector<8x324xf32>
    %37 = tpu.concatenate %28, %29, %30, %31, %32, %33, %34, %35, %36 in 0 : vector<8x324xf32>, vector<8x324xf32>, vector<8x324xf32>, vector<8x324xf32>, vector<8x324xf32>, vector<8x324xf32>, vector<8x324xf32>, vector<8x324xf32>, vector<8x324xf32> -> vector<72x324xf32>
    %cst_15 = arith.constant dense<0.000000e+00> : vector<8x324xf32>
    %38 = tpu.matmul %24, %37, %cst_15 {dimension_numbers = #tpu.dot_dimension_numbers<[1], [0], [0], [1], [0, 0, 1, 1], [], []>} : vector<8x72xf32>, vector<72x324xf32>, vector<8x324xf32> -> vector<8x324xf32>
    %39 = vector.broadcast %25 : vector<8x1xf32> to vector<8x324xf32>
    %40 = arith.addf %38, %39 : vector<8x324xf32>
    %cst_16 = arith.constant 0.000000e+00 : f32
    %41 = vector.broadcast %cst_16 : f32 to vector<8x324xf32>
    %42 = arith.maximumf %40, %41 : vector<8x324xf32>
    %cst_17 = arith.constant 0.000000e+00 : f32
    %43 = vector.broadcast %cst_17 : f32 to vector<8x19xf32>
    %44 = tpu.concatenate %42, %43 in 1 : vector<8x324xf32>, vector<8x19xf32> -> vector<8x343xf32>
    %45 = vector.extract_strided_slice %44 {offsets = [0, 0], sizes = [8, 324], strides = [1, 1]} : vector<8x343xf32> to vector<8x324xf32>
    %46 = vector.extract_strided_slice %44 {offsets = [0, 1], sizes = [8, 324], strides = [1, 1]} : vector<8x343xf32> to vector<8x324xf32>
    %47 = vector.extract_strided_slice %44 {offsets = [0, 18], sizes = [8, 324], strides = [1, 1]} : vector<8x343xf32> to vector<8x324xf32>
    %48 = vector.extract_strided_slice %44 {offsets = [0, 19], sizes = [8, 324], strides = [1, 1]} : vector<8x343xf32> to vector<8x324xf32>
    %49 = arith.maximumf %45, %46 : vector<8x324xf32>
    %50 = arith.maximumf %47, %48 : vector<8x324xf32>
    %51 = arith.maximumf %49, %50 : vector<8x324xf32>
    %52 = vector.extract_strided_slice %51 {offsets = [0, 0], sizes = [1, 324], strides = [1, 1]} : vector<8x324xf32> to vector<1x324xf32>
    %53 = vector.extract_strided_slice %51 {offsets = [1, 0], sizes = [1, 324], strides = [1, 1]} : vector<8x324xf32> to vector<1x324xf32>
    %54 = vector.extract_strided_slice %51 {offsets = [2, 0], sizes = [1, 324], strides = [1, 1]} : vector<8x324xf32> to vector<1x324xf32>
    %55 = vector.extract_strided_slice %51 {offsets = [3, 0], sizes = [1, 324], strides = [1, 1]} : vector<8x324xf32> to vector<1x324xf32>
    %56 = vector.extract_strided_slice %51 {offsets = [4, 0], sizes = [1, 324], strides = [1, 1]} : vector<8x324xf32> to vector<1x324xf32>
    %57 = vector.extract_strided_slice %51 {offsets = [5, 0], sizes = [1, 324], strides = [1, 1]} : vector<8x324xf32> to vector<1x324xf32>
    %58 = vector.extract_strided_slice %51 {offsets = [6, 0], sizes = [1, 324], strides = [1, 1]} : vector<8x324xf32> to vector<1x324xf32>
    %59 = vector.extract_strided_slice %51 {offsets = [7, 0], sizes = [1, 324], strides = [1, 1]} : vector<8x324xf32> to vector<1x324xf32>
    %60 = tpu.concatenate %52, %53, %54, %55, %56, %57, %58, %59 in 1 : vector<1x324xf32>, vector<1x324xf32>, vector<1x324xf32>, vector<1x324xf32>, vector<1x324xf32>, vector<1x324xf32>, vector<1x324xf32>, vector<1x324xf32> -> vector<1x2592xf32>
    %c0_18 = arith.constant 0 : index
    %c0_19 = arith.constant 0 : index
    %61 = vector.load %arg7[%c0_18, %c0_19] : memref<2592x32xf32, #tpu.memory_space<vmem>>, vector<2592x32xf32>
    %cst_20 = arith.constant dense<0.000000e+00> : vector<1x32xf32>
    %62 = tpu.matmul %60, %61, %cst_20 {dimension_numbers = #tpu.dot_dimension_numbers<[1], [0], [0], [1], [0, 0, 1, 1], [], []>} : vector<1x2592xf32>, vector<2592x32xf32>, vector<1x32xf32> -> vector<1x32xf32>
    %c0_21 = arith.constant 0 : index
    %c0_22 = arith.constant 0 : index
    %63 = vector.load %arg8[%c0_21, %c0_22] : memref<1x32xf32, #tpu.memory_space<vmem>>, vector<1x32xf32>
    %64 = arith.addf %62, %63 : vector<1x32xf32>
    %cst_23 = arith.constant 0.000000e+00 : f32
    %65 = vector.broadcast %cst_23 : f32 to vector<1x32xf32>
    %66 = arith.maximumf %64, %65 : vector<1x32xf32>
    %c0_24 = arith.constant 0 : index
    %c0_25 = arith.constant 0 : index
    %67 = vector.load %arg9[%c0_24, %c0_25] : memref<32x10xf32, #tpu.memory_space<vmem>>, vector<32x10xf32>
    %cst_26 = arith.constant dense<0.000000e+00> : vector<1x10xf32>
    %68 = tpu.matmul %66, %67, %cst_26 {dimension_numbers = #tpu.dot_dimension_numbers<[1], [0], [0], [1], [0, 0, 1, 1], [], []>} : vector<1x32xf32>, vector<32x10xf32>, vector<1x10xf32> -> vector<1x10xf32>
    %c0_27 = arith.constant 0 : index
    %c0_28 = arith.constant 0 : index
    %69 = vector.load %arg10[%c0_27, %c0_28] : memref<1x10xf32, #tpu.memory_space<vmem>>, vector<1x10xf32>
    %70 = arith.addf %68, %69 : vector<1x10xf32>
    %c0_29 = arith.constant 0 : index
    %c0_30 = arith.constant 0 : index
    %c0_31 = arith.constant 0 : index
    %71 = vector.load %arg11[%c0_29, %c0_30, %c0_31] : memref<1x1x10xf32, #tpu.memory_space<vmem>>, vector<1x1x10xf32>
    %72 = vector.shape_cast %71 : vector<1x1x10xf32> to vector<1x10xf32>
    %73 = vector.shape_cast %70 : vector<1x10xf32> to vector<1x1x10xf32>
    tpu.vector_store %arg11[%c0_29, %c0_30, %c0_31], %73 {strides = array<i32>} : memref<1x1x10xf32, #tpu.memory_space<vmem>>, vector<1x1x10xf32>,
    return
  }
  func.func @transform_0(%arg0: i32) -> (i32, i32, i32) {
    %c0_i32 = arith.constant 0 : i32
    %c0_i32_0 = arith.constant 0 : i32
    %c0_i32_1 = arith.constant 0 : i32
    return %arg0, %c0_i32, %c0_i32_0 : i32, i32, i32
  }
  func.func @transform_1(%arg0: i32) -> (i32, i32) {
    %c0_i32 = arith.constant 0 : i32
    %c0_i32_0 = arith.constant 0 : i32
    %c0_i32_1 = arith.constant 0 : i32
    return %c0_i32, %c0_i32_0 : i32, i32
  }
  func.func @transform_2(%arg0: i32) -> (i32, i32) {
    %c0_i32 = arith.constant 0 : i32
    %c0_i32_0 = arith.constant 0 : i32
    %c0_i32_1 = arith.constant 0 : i32
    return %c0_i32, %c0_i32_0 : i32, i32
  }
  func.func @transform_3(%arg0: i32) -> (i32, i32) {
    %c0_i32 = arith.constant 0 : i32
    %c0_i32_0 = arith.constant 0 : i32
    %c0_i32_1 = arith.constant 0 : i32
    return %c0_i32, %c0_i32_0 : i32, i32
  }
  func.func @transform_4(%arg0: i32) -> (i32, i32) {
    %c0_i32 = arith.constant 0 : i32
    %c0_i32_0 = arith.constant 0 : i32
    %c0_i32_1 = arith.constant 0 : i32
    return %c0_i32, %c0_i32_0 : i32, i32
  }
  func.func @transform_5(%arg0: i32) -> (i32, i32) {
    %c0_i32 = arith.constant 0 : i32
    %c0_i32_0 = arith.constant 0 : i32
    %c0_i32_1 = arith.constant 0 : i32
    return %c0_i32, %c0_i32_0 : i32, i32
  }
  func.func @transform_6(%arg0: i32) -> (i32, i32) {
    %c0_i32 = arith.constant 0 : i32
    %c0_i32_0 = arith.constant 0 : i32
    %c0_i32_1 = arith.constant 0 : i32
    return %c0_i32, %c0_i32_0 : i32, i32
  }
  func.func @transform_7(%arg0: i32) -> (i32, i32) {
    %c0_i32 = arith.constant 0 : i32
    %c0_i32_0 = arith.constant 0 : i32
    %c0_i32_1 = arith.constant 0 : i32
    return %c0_i32, %c0_i32_0 : i32, i32
  }
  func.func @transform_8(%arg0: i32) -> (i32, i32) {
    %c0_i32 = arith.constant 0 : i32
    %c0_i32_0 = arith.constant 0 : i32
    %c0_i32_1 = arith.constant 0 : i32
    return %c0_i32, %c0_i32_0 : i32, i32
  }
  func.func @transform_9(%arg0: i32) -> (i32, i32) {
    %c0_i32 = arith.constant 0 : i32
    %c0_i32_0 = arith.constant 0 : i32
    %c0_i32_1 = arith.constant 0 : i32
    return %c0_i32, %c0_i32_0 : i32, i32
  }
  func.func @transform_10(%arg0: i32) -> (i32, i32, i32) {
    %c0_i32 = arith.constant 0 : i32
    %c0_i32_0 = arith.constant 0 : i32
    %c0_i32_1 = arith.constant 0 : i32
    return %arg0, %c0_i32, %c0_i32_0 : i32, i32, i32
  }
}

</mosaic_0001>

<llo_original>
// kernel: forward.1
$region0: #{forward.1}
  #allocation0 [shape = 'u32[]', space=smem, size = 0x4, offset = 0x4, fixed_abs, tag = 'smem constant byte address 0x4 - core index']
  #allocation1 [shape = 'u32[144,128]{1,0:T(1,128)}', space=vmem, size = 0x12000, scoped, tag = 'internal scratch']
  %s0 = inlined_call_operand.vmem [shape: f32[2,4,324], index: 0, kind: input, shape index: {}]
  %s1 = inlined_call_operand.hbm [shape: f32[8,36], index: 1, kind: input, shape index: {}]
  %s2 = inlined_call_operand.hbm [shape: f32[8,1], index: 2, kind: input, shape index: {}]
  %s3 = inlined_call_operand.hbm [shape: f32[1,324], index: 3, kind: input, shape index: {}]
  %s4 = inlined_call_operand.hbm [shape: f32[8,72], index: 4, kind: input, shape index: {}]
  %s5 = inlined_call_operand.hbm [shape: f32[8,1], index: 5, kind: input, shape index: {}]
  %s6 = inlined_call_operand.hbm [shape: f32[2592,32], index: 6, kind: input, shape index: {}]
  %s7 = inlined_call_operand.hbm [shape: f32[1,32], index: 7, kind: input, shape index: {}]
  %s8 = inlined_call_operand.hbm [shape: f32[32,10], index: 8, kind: input, shape index: {}]
  %s9 = inlined_call_operand.hbm [shape: f32[1,10], index: 9, kind: input, shape index: {}]
  %s10 = inlined_call_operand.hbm [shape: f32[2,1,10], index: 10, kind: output, shape index: {}]
  %s11 = sld [smem:[#allocation0]]
  $region109: #{forward.1} parent=0
    _
  %s13 = ssub.s32 1, %s11
  %s14 = scalar_select 0, %s13, %s11
  $region1: #{forward.1} parent=0
    #allocation2 [shape = 'u8[4096]{0}', space=vmem, size = 0x1000, scoped, tag = 'input window, operand 1, single buffered']
    #allocation3 [shape = 's32[2]{0}', space=sflag, size = 0x8, scoped, tag = 'scoped memory for forward.1']
    #allocation4 [shape = 's32[2]{0}', space=sflag, size = 0x8, scoped, tag = 'scoped memory for forward.1']
    #allocation5 [shape = 'u8[4096]{0}', space=vmem, size = 0x1000, scoped, tag = 'input window, operand 2, single buffered']
    #allocation6 [shape = 's32[1]{0}', space=sflag, size = 0x4, scoped, tag = 'scoped memory for forward.1']
    #allocation7 [shape = 'u8[1536]{0}', space=vmem, size = 0x800, scoped, tag = 'input window, operand 3, single buffered']
    #allocation8 [shape = 'u8[4096]{0}', space=vmem, size = 0x1000, scoped, tag = 'input window, operand 4, single buffered']
    #allocation9 [shape = 's32[1]{0}', space=sflag, size = 0x4, scoped, tag = 'scoped memory for forward.1']
    #allocation10 [shape = 'u8[4096]{0}', space=vmem, size = 0x1000, scoped, tag = 'input window, operand 5, single buffered']
    #allocation11 [shape = 'u8[1327104]{0}', space=vmem, size = 0x144000, scoped, tag = 'input window, operand 6, single buffered']
    #allocation12 [shape = 's32[1]{0}', space=sflag, size = 0x4, scoped, tag = 'scoped memory for forward.1']
    #allocation13 [shape = 'u8[512]{0}', space=vmem, size = 0x400, scoped, tag = 'input window, operand 7, single buffered']
    #allocation14 [shape = 'u8[16384]{0}', space=vmem, size = 0x4000, scoped, tag = 'input window, operand 8, single buffered']
    #allocation15 [shape = 's32[1]{0}', space=sflag, size = 0x4, scoped, tag = 'scoped memory for forward.1']
    #allocation16 [shape = 'u8[512]{0}', space=vmem, size = 0x400, scoped, tag = 'input window, operand 9, single buffered']
    #allocation17 [shape = 'u8[1024]{0}', space=vmem, size = 0x400, scoped, tag = 'output window, operand 0']
    %15 = vsyncpa [#allocation3], 0
    %16 = vsyncpa [#allocation6], 0
    %17 = vsyncpa [#allocation9], 0
    %18 = vsyncpa [#allocation12], 0
    %19 = vsyncpa [#allocation15], 0
    %20 = vsyncpa [#allocation4], 0
    %s21 = scalar_lea.sflag [#allocation4], 1
    %22 = vsyncpa %s21, 0
    loop: start=0, step=1, limit=4
    $region2: #{forward.1} parent=1 // loop_pre_header
      _
    $region3: #{forward.1} parent=1 // loop_header
      %s24 = sphi 0, %s28
      %p25 = scmp.ge.s32.totalorder %s24, 4
      %s34 = sphi 0, %s36
      %s37 = sphi 0, %s34
      %s38 = sphi 0, %s37
      %s54 = sphi 0, %s38
      %s58 = sphi 0, %s58
      %s60 = sphi 0, %s58
      %s61 = sphi 0, %s60
      %s75 = sphi 0, %s61
      %s79 = sphi 0, %s79
      %s81 = sphi 0, %s79
      %s82 = sphi 0, %s81
      %s96 = sphi 0, %s82
      %s100 = sphi 0, %s100
      %s102 = sphi 0, %s100
      %s103 = sphi 0, %s102
      %s117 = sphi 0, %s103
      %s121 = sphi 0, %s121
      %s123 = sphi 0, %s121
      %s124 = sphi 0, %s123
      %s138 = sphi 0, %s124
      %s142 = sphi 0, %s142
      %s144 = sphi 0, %s142
      %s145 = sphi 0, %s144
      %s159 = sphi 0, %s145
      %s163 = sphi 0, %s163
      %s165 = sphi 0, %s163
      %s166 = sphi 0, %s165
      %s180 = sphi 0, %s166
      %s184 = sphi 0, %s184
      %s186 = sphi 0, %s184
      %s187 = sphi 0, %s186
      %s201 = sphi 0, %s187
      %s205 = sphi 0, %s205
      %s207 = sphi 0, %s205
      %s208 = sphi 0, %s207
      %s222 = sphi 0, %s208
      %s226 = sphi 0, %s226
      %s228 = sphi 0, %s226
      %s229 = sphi 0, %s228
      %s243 = sphi 0, %s229
      %s249 = sphi 0, %s251
      %s252 = sphi 0, %s249
      %s253 = sphi 0, %s252
      %s269 = sphi 0, %s253
    $region4: #{forward.1} parent=1 // loop_header_branch
      %27 = sbr.rel (%p25) target = $region8
    $region5: #{forward.1} parent=1 // loop_body
      %s29 = ssub.s32 %s24, 1
      %s30 = ssub.s32 %s24, 2
      %s31 = sadd.s32 %s24, 1
      %s32 = ssub.s32 %s24, %s31
      %p33 = scmp.eq.s32.totalorder %s32, 0
      %s35 = sadd.s32 %s34, 1
      %s36 = scalar_select %p33, %s34, %s35
      %p39 = pneg %p33
      %p40 = scmp.eq.s32.totalorder %s24, 1
      %p41 = por %p39, %p40
      %p42 = scmp.ne.s32.totalorder %s34, %s37
      %p43 = scmp.eq.s32.totalorder %s24, 0
      %p44 = por %p42, %p43
      %p45 = scmp.ne.s32.totalorder %s34, %s37
      %p46 = scmp.eq.s32.totalorder %s29, 1
      %p47 = por %p45, %p46
      %p48 = scmp.ne.s32.totalorder %s37, %s38
      %p49 = scmp.eq.s32.totalorder %s29, 0
      %p50 = por %p48, %p49
      %p51 = scmp.ne.s32.totalorder %s37, %s38
      %p52 = scmp.eq.s32.totalorder %s30, 1
      %p53 = por %p51, %p52
      %p55 = scmp.ne.s32.totalorder %s38, %s54
      %p56 = scmp.eq.s32.totalorder %s30, 0
      %p57 = por %p55, %p56
      %s59 = sadd.s32 %s58, 1
      %p62 = scmp.eq.s32.totalorder %s24, 1
      %p63 = scmp.ne.s32.totalorder %s58, %s60
      %p64 = scmp.eq.s32.totalorder %s24, 0
      %p65 = por %p63, %p64
      %p66 = scmp.ne.s32.totalorder %s58, %s60
      %p67 = scmp.eq.s32.totalorder %s29, 1
      %p68 = por %p66, %p67
      %p69 = scmp.ne.s32.totalorder %s60, %s61
      %p70 = scmp.eq.s32.totalorder %s29, 0
      %p71 = por %p69, %p70
      %p72 = scmp.ne.s32.totalorder %s60, %s61
      %p73 = scmp.eq.s32.totalorder %s30, 1
      %p74 = por %p72, %p73
      %p76 = scmp.ne.s32.totalorder %s61, %s75
      %p77 = scmp.eq.s32.totalorder %s30, 0
      %p78 = por %p76, %p77
      %s80 = sadd.s32 %s79, 1
      %p83 = scmp.eq.s32.totalorder %s24, 1
      %p84 = scmp.ne.s32.totalorder %s79, %s81
      %p85 = scmp.eq.s32.totalorder %s24, 0
      %p86 = por %p84, %p85
      %p87 = scmp.ne.s32.totalorder %s79, %s81
      %p88 = scmp.eq.s32.totalorder %s29, 1
      %p89 = por %p87, %p88
      %p90 = scmp.ne.s32.totalorder %s81, %s82
      %p91 = scmp.eq.s32.totalorder %s29, 0
      %p92 = por %p90, %p91
      %p93 = scmp.ne.s32.totalorder %s81, %s82
      %p94 = scmp.eq.s32.totalorder %s30, 1
      %p95 = por %p93, %p94
      %p97 = scmp.ne.s32.totalorder %s82, %s96
      %p98 = scmp.eq.s32.totalorder %s30, 0
      %p99 = por %p97, %p98
      %s101 = sadd.s32 %s100, 1
      %p104 = scmp.eq.s32.totalorder %s24, 1
      %p105 = scmp.ne.s32.totalorder %s100, %s102
      %p106 = scmp.eq.s32.totalorder %s24, 0
      %p107 = por %p105, %p106
      %p108 = scmp.ne.s32.totalorder %s100, %s102
      %p109 = scmp.eq.s32.totalorder %s29, 1
      %p110 = por %p108, %p109
      %p111 = scmp.ne.s32.totalorder %s102, %s103
      %p112 = scmp.eq.s32.totalorder %s29, 0
      %p113 = por %p111, %p112
      %p114 = scmp.ne.s32.totalorder %s102, %s103
      %p115 = scmp.eq.s32.totalorder %s30, 1
      %p116 = por %p114, %p115
      %p118 = scmp.ne.s32.totalorder %s103, %s117
      %p119 = scmp.eq.s32.totalorder %s30, 0
      %p120 = por %p118, %p119
      %s122 = sadd.s32 %s121, 1
      %p125 = scmp.eq.s32.totalorder %s24, 1
      %p126 = scmp.ne.s32.totalorder %s121, %s123
      %p127 = scmp.eq.s32.totalorder %s24, 0
      %p128 = por %p126, %p127
      %p129 = scmp.ne.s32.totalorder %s121, %s123
      %p130 = scmp.eq.s32.totalorder %s29, 1
      %p131 = por %p129, %p130
      %p132 = scmp.ne.s32.totalorder %s123, %s124
      %p133 = scmp.eq.s32.totalorder %s29, 0
      %p134 = por %p132, %p133
      %p135 = scmp.ne.s32.totalorder %s123, %s124
      %p136 = scmp.eq.s32.totalorder %s30, 1
      %p137 = por %p135, %p136
      %p139 = scmp.ne.s32.totalorder %s124, %s138
      %p140 = scmp.eq.s32.totalorder %s30, 0
      %p141 = por %p139, %p140
      %s143 = sadd.s32 %s142, 1
      %p146 = scmp.eq.s32.totalorder %s24, 1
      %p147 = scmp.ne.s32.totalorder %s142, %s144
      %p148 = scmp.eq.s32.totalorder %s24, 0
      %p149 = por %p147, %p148
      %p150 = scmp.ne.s32.totalorder %s142, %s144
      %p151 = scmp.eq.s32.totalorder %s29, 1
      %p152 = por %p150, %p151
      %p153 = scmp.ne.s32.totalorder %s144, %s145
      %p154 = scmp.eq.s32.totalorder %s29, 0
      %p155 = por %p153, %p154
      %p156 = scmp.ne.s32.totalorder %s144, %s145
      %p157 = scmp.eq.s32.totalorder %s30, 1
      %p158 = por %p156, %p157
      %p160 = scmp.ne.s32.totalorder %s145, %s159
      %p161 = scmp.eq.s32.totalorder %s30, 0
      %p162 = por %p160, %p161
      %s164 = sadd.s32 %s163, 1
      %p167 = scmp.eq.s32.totalorder %s24, 1
      %p168 = scmp.ne.s32.totalorder %s163, %s165
      %p169 = scmp.eq.s32.totalorder %s24, 0
      %p170 = por %p168, %p169
      %p171 = scmp.ne.s32.totalorder %s163, %s165
      %p172 = scmp.eq.s32.totalorder %s29, 1
      %p173 = por %p171, %p172
      %p174 = scmp.ne.s32.totalorder %s165, %s166
      %p175 = scmp.eq.s32.totalorder %s29, 0
      %p176 = por %p174, %p175
      %p177 = scmp.ne.s32.totalorder %s165, %s166
      %p178 = scmp.eq.s32.totalorder %s30, 1
      %p179 = por %p177, %p178
      %p181 = scmp.ne.s32.totalorder %s166, %s180
      %p182 = scmp.eq.s32.totalorder %s30, 0
      %p183 = por %p181, %p182
      %s185 = sadd.s32 %s184, 1
      %p188 = scmp.eq.s32.totalorder %s24, 1
      %p189 = scmp.ne.s32.totalorder %s184, %s186
      %p190 = scmp.eq.s32.totalorder %s24, 0
      %p191 = por %p189, %p190
      %p192 = scmp.ne.s32.totalorder %s184, %s186
      %p193 = scmp.eq.s32.totalorder %s29, 1
      %p194 = por %p192, %p193
      %p195 = scmp.ne.s32.totalorder %s186, %s187
      %p196 = scmp.eq.s32.totalorder %s29, 0
      %p197 = por %p195, %p196
      %p198 = scmp.ne.s32.totalorder %s186, %s187
      %p199 = scmp.eq.s32.totalorder %s30, 1
      %p200 = por %p198, %p199
      %p202 = scmp.ne.s32.totalorder %s187, %s201
      %p203 = scmp.eq.s32.totalorder %s30, 0
      %p204 = por %p202, %p203
      %s206 = sadd.s32 %s205, 1
      %p209 = scmp.eq.s32.totalorder %s24, 1
      %p210 = scmp.ne.s32.totalorder %s205, %s207
      %p211 = scmp.eq.s32.totalorder %s24, 0
      %p212 = por %p210, %p211
      %p213 = scmp.ne.s32.totalorder %s205, %s207
      %p214 = scmp.eq.s32.totalorder %s29, 1
      %p215 = por %p213, %p214
      %p216 = scmp.ne.s32.totalorder %s207, %s208
      %p217 = scmp.eq.s32.totalorder %s29, 0
      %p218 = por %p216, %p217
      %p219 = scmp.ne.s32.totalorder %s207, %s208
      %p220 = scmp.eq.s32.totalorder %s30, 1
      %p221 = por %p219, %p220
      %p223 = scmp.ne.s32.totalorder %s208, %s222
      %p224 = scmp.eq.s32.totalorder %s30, 0
      %p225 = por %p223, %p224
      %s227 = sadd.s32 %s226, 1
      %p230 = scmp.eq.s32.totalorder %s24, 1
      %p231 = scmp.ne.s32.totalorder %s226, %s228
      %p232 = scmp.eq.s32.totalorder %s24, 0
      %p233 = por %p231, %p232
      %p234 = scmp.ne.s32.totalorder %s226, %s228
      %p235 = scmp.eq.s32.totalorder %s29, 1
      %p236 = por %p234, %p235
      %p237 = scmp.ne.s32.totalorder %s228, %s229
      %p238 = scmp.eq.s32.totalorder %s29, 0
      %p239 = por %p237, %p238
      %p240 = scmp.ne.s32.totalorder %s228, %s229
      %p241 = scmp.eq.s32.totalorder %s30, 1
      %p242 = por %p240, %p241
      %p244 = scmp.ne.s32.totalorder %s229, %s243
      %p245 = scmp.eq.s32.totalorder %s30, 0
      %p246 = por %p244, %p245
      %s247 = ssub.s32 %s24, %s31
      %p248 = scmp.eq.s32.totalorder %s247, 0
      %s250 = sadd.s32 %s249, 1
      %s251 = scalar_select %p248, %s249, %s250
      %p254 = pneg %p248
      %p255 = scmp.eq.s32.totalorder %s24, 1
      %p256 = por %p254, %p255
      %p257 = scmp.ne.s32.totalorder %s249, %s252
      %p258 = scmp.eq.s32.totalorder %s24, 0
      %p259 = por %p257, %p258
      %p260 = scmp.ne.s32.totalorder %s249, %s252
      %p261 = scmp.eq.s32.totalorder %s29, 1
      %p262 = por %p260, %p261
      %p263 = scmp.ne.s32.totalorder %s252, %s253
      %p264 = scmp.eq.s32.totalorder %s29, 0
      %p265 = por %p263, %p264
      %p266 = scmp.ne.s32.totalorder %s252, %s253
      %p267 = scmp.eq.s32.totalorder %s30, 1
      %p268 = por %p266, %p267
      %p270 = scmp.ne.s32.totalorder %s253, %s269
      %p271 = scmp.eq.s32.totalorder %s30, 0
      %p272 = por %p270, %p271
      %p273 = scmp.le.s32.totalorder 1, %s24
      %p274 = scmp.lt.s32.totalorder %s24, 3
      %p275 = pnand %p273, %p274
      %p276 = pneg %p275
      // Predicated region
      $region9: #{forward.1} parent=5 // pred_check
        _
      $region10: #{forward.1} parent=5 // pred_check_branch
        %278 = sbr.rel (%p275) target = $region12
      $region11: #{forward.1} parent=5 // pred_region
        %s279 = ssub.s32 %s24, 1
        // Predicated region
        $region13: #{forward.1} parent=11 // pred_check
          %p280 = pneg %p71
        $region14: #{forward.1} parent=11 // pred_check_branch
          %282 = sbr.rel (%p280) target = $region16
        $region15: #{forward.1} parent=11 // pred_region
          %s284 = ssub.s32 128, 128
          %285 = vsyncadd [#allocation3], %s284
          %s287 = sshll.u32 [#allocation2], 4
          %s288 = int_to_ptr.vmem [resolvable:$true] %s287
          %290 = dma.hbm_to_vmem [thread:$0]  %s1, 128, %s288, [#allocation3]
        $region16: #{forward.1} parent=11 // pred_fallthru
          _
        // Predicated region
        $region17: #{forward.1} parent=11 // pred_check
          %p291 = pneg %p92
        $region18: #{forward.1} parent=11 // pred_check_branch
          %293 = sbr.rel (%p291) target = $region20
        $region19: #{forward.1} parent=11 // pred_region
          %s295 = ssub.s32 128, 128
          %296 = vsyncadd [#allocation6], %s295
          %s298 = sshll.u32 [#allocation5], 4
          %s299 = int_to_ptr.vmem [resolvable:$true] %s298
          %301 = dma.hbm_to_vmem [thread:$0]  %s2, 128, %s299, [#allocation6]
        $region20: #{forward.1} parent=11 // pred_fallthru
          _
        // Predicated region
        $region21: #{forward.1} parent=11 // pred_check
          %p302 = pneg %p113
        $region22: #{forward.1} parent=11 // pred_check_branch
          %304 = sbr.rel (%p302) target = $region24
        $region23: #{forward.1} parent=11 // pred_region
          %s306 = ssub.s32 48, 48
          %307 = vsyncadd [#allocation6], %s306
          %s309 = sshll.u32 [#allocation7], 4
          %s310 = int_to_ptr.vmem [resolvable:$true] %s309
          %312 = dma.hbm_to_vmem [thread:$0]  %s3, 48, %s310, [#allocation6]
        $region24: #{forward.1} parent=11 // pred_fallthru
          _
        // Predicated region
        $region25: #{forward.1} parent=11 // pred_check
          %p313 = pneg %p134
        $region26: #{forward.1} parent=11 // pred_check_branch
          %315 = sbr.rel (%p313) target = $region28
        $region27: #{forward.1} parent=11 // pred_region
          %s317 = ssub.s32 128, 128
          %318 = vsyncadd [#allocation9], %s317
          %s320 = sshll.u32 [#allocation8], 4
          %s321 = int_to_ptr.vmem [resolvable:$true] %s320
          %323 = dma.hbm_to_vmem [thread:$0]  %s4, 128, %s321, [#allocation9]
        $region28: #{forward.1} parent=11 // pred_fallthru
          _
        // Predicated region
        $region29: #{forward.1} parent=11 // pred_check
          %p324 = pneg %p155
        $region30: #{forward.1} parent=11 // pred_check_branch
          %326 = sbr.rel (%p324) target = $region32
        $region31: #{forward.1} parent=11 // pred_region
          %s328 = ssub.s32 128, 128
          %329 = vsyncadd [#allocation9], %s328
          %s331 = sshll.u32 [#allocation10], 4
          %s332 = int_to_ptr.vmem [resolvable:$true] %s331
          %334 = dma.hbm_to_vmem [thread:$0]  %s5, 128, %s332, [#allocation9]
        $region32: #{forward.1} parent=11 // pred_fallthru
          _
        // Predicated region
        $region33: #{forward.1} parent=11 // pred_check
          %p335 = pneg %p176
        $region34: #{forward.1} parent=11 // pred_check_branch
          %337 = sbr.rel (%p335) target = $region36
        $region35: #{forward.1} parent=11 // pred_region
          %s339 = ssub.s32 41472, 41472
          %340 = vsyncadd [#allocation12], %s339
          %s341 = sshll.u32 [#allocation11], 4
          %s342 = int_to_ptr.vmem [resolvable:$true] %s341
          %347 = dma.hbm_to_vmem [thread:$0]  %s6, 41472, %s342, [#allocation12], 128, 128, 8
        $region36: #{forward.1} parent=11 // pred_fallthru
          _
        // Predicated region
        $region37: #{forward.1} parent=11 // pred_check
          %p348 = pneg %p197
        $region38: #{forward.1} parent=11 // pred_check_branch
          %350 = sbr.rel (%p348) target = $region40
        $region39: #{forward.1} parent=11 // pred_region
          %s352 = ssub.s32 16, 16
          %353 = vsyncadd [#allocation12], %s352
          %s355 = sshll.u32 [#allocation13], 4
          %s356 = int_to_ptr.vmem [resolvable:$true] %s355
          %358 = dma.hbm_to_vmem [thread:$0]  %s7, 16, %s356, [#allocation12]
        $region40: #{forward.1} parent=11 // pred_fallthru
          _
        // Predicated region
        $region41: #{forward.1} parent=11 // pred_check
          %p359 = pneg %p218
        $region42: #{forward.1} parent=11 // pred_check_branch
          %361 = sbr.rel (%p359) target = $region44
        $region43: #{forward.1} parent=11 // pred_region
          %s363 = ssub.s32 512, 512
          %364 = vsyncadd [#allocation15], %s363
          %s365 = sshll.u32 [#allocation14], 4
          %s366 = int_to_ptr.vmem [resolvable:$true] %s365
          %371 = dma.hbm_to_vmem [thread:$0]  %s8, 512, %s366, [#allocation15], 128, 128, 8
        $region44: #{forward.1} parent=11 // pred_fallthru
          _
        // Predicated region
        $region45: #{forward.1} parent=11 // pred_check
          %p372 = pneg %p239
        $region46: #{forward.1} parent=11 // pred_check_branch
          %374 = sbr.rel (%p372) target = $region48
        $region47: #{forward.1} parent=11 // pred_region
          %s376 = ssub.s32 16, 16
          %377 = vsyncadd [#allocation15], %s376
          %s379 = sshll.u32 [#allocation16], 4
          %s380 = int_to_ptr.vmem [resolvable:$true] %s379
          %382 = dma.hbm_to_vmem [thread:$0]  %s9, 16, %s380, [#allocation15]
        $region48: #{forward.1} parent=11 // pred_fallthru
          _
      $region12: #{forward.1} parent=5 // pred_fallthru
        _
      %p383 = scmp.lt.s32.totalorder %s24, 2
      // Predicated region
      $region49: #{forward.1} parent=5 // pred_check
        %p384 = pneg %p383
      $region50: #{forward.1} parent=5 // pred_check_branch
        %386 = sbr.rel (%p384) target = $region52
      $region51: #{forward.1} parent=5 // pred_region
        // Predicated region
        $region53: #{forward.1} parent=51 // pred_check
          %p387 = pneg %p44
        $region54: #{forward.1} parent=51 // pred_check_branch
          %389 = sbr.rel (%p387) target = $region56
        $region55: #{forward.1} parent=51 // pred_region
          %p390 = scmp.lt.s32.totalorder %s24, 1
          %s391 = scalar_select %p390, %s24, 1
          %s392 = smul.addr %s391, 3
          %s393 = smul.addr %s392, 4
          %s394 = scalar_lea.vmem %s0, %s393
        $region56: #{forward.1} parent=51 // pred_fallthru
          _
      $region52: #{forward.1} parent=5 // pred_fallthru
        _
      %p395 = scmp.le.s32.totalorder 1, %s24
      %p396 = scmp.lt.s32.totalorder %s24, 3
      %p397 = pnand %p395, %p396
      %p398 = pneg %p397
      // Predicated region
      $region57: #{forward.1} parent=5 // pred_check
        _
      $region58: #{forward.1} parent=5 // pred_check_branch
        %400 = sbr.rel (%p397) target = $region60
      $region59: #{forward.1} parent=5 // pred_region
        %s401 = ssub.s32 %s24, 1
        // Predicated region
        $region61: #{forward.1} parent=59 // pred_check
          %p402 = pneg %p71
        $region62: #{forward.1} parent=59 // pred_check_branch
          %404 = sbr.rel (%p402) target = $region64
        $region63: #{forward.1} parent=59 // pred_region
          %405 = dma.done [#allocation3], 128
        $region64: #{forward.1} parent=59 // pred_fallthru
          _
        // Predicated region
        $region65: #{forward.1} parent=59 // pred_check
          %p406 = pneg %p92
        $region66: #{forward.1} parent=59 // pred_check_branch
          %408 = sbr.rel (%p406) target = $region68
        $region67: #{forward.1} parent=59 // pred_region
          %409 = dma.done [#allocation6], 128
        $region68: #{forward.1} parent=59 // pred_fallthru
          _
        // Predicated region
        $region69: #{forward.1} parent=59 // pred_check
          %p410 = pneg %p113
        $region70: #{forward.1} parent=59 // pred_check_branch
          %412 = sbr.rel (%p410) target = $region72
        $region71: #{forward.1} parent=59 // pred_region
          %413 = dma.done [#allocation6], 48
        $region72: #{forward.1} parent=59 // pred_fallthru
          _
        // Predicated region
        $region73: #{forward.1} parent=59 // pred_check
          %p414 = pneg %p134
        $region74: #{forward.1} parent=59 // pred_check_branch
          %416 = sbr.rel (%p414) target = $region76
        $region75: #{forward.1} parent=59 // pred_region
          %417 = dma.done [#allocation9], 128
        $region76: #{forward.1} parent=59 // pred_fallthru
          _
        // Predicated region
        $region77: #{forward.1} parent=59 // pred_check
          %p418 = pneg %p155
        $region78: #{forward.1} parent=59 // pred_check_branch
          %420 = sbr.rel (%p418) target = $region80
        $region79: #{forward.1} parent=59 // pred_region
          %421 = dma.done [#allocation9], 128
        $region80: #{forward.1} parent=59 // pred_fallthru
          _
        // Predicated region
        $region81: #{forward.1} parent=59 // pred_check
          %p422 = pneg %p176
        $region82: #{forward.1} parent=59 // pred_check_branch
          %424 = sbr.rel (%p422) target = $region84
        $region83: #{forward.1} parent=59 // pred_region
          %425 = dma.done [#allocation12], 41472
        $region84: #{forward.1} parent=59 // pred_fallthru
          _
        // Predicated region
        $region85: #{forward.1} parent=59 // pred_check
          %p426 = pneg %p197
        $region86: #{forward.1} parent=59 // pred_check_branch
          %428 = sbr.rel (%p426) target = $region88
        $region87: #{forward.1} parent=59 // pred_region
          %429 = dma.done [#allocation12], 16
        $region88: #{forward.1} parent=59 // pred_fallthru
          _
        // Predicated region
        $region89: #{forward.1} parent=59 // pred_check
          %p430 = pneg %p218
        $region90: #{forward.1} parent=59 // pred_check_branch
          %432 = sbr.rel (%p430) target = $region92
        $region91: #{forward.1} parent=59 // pred_region
          %433 = dma.done [#allocation15], 512
        $region92: #{forward.1} parent=59 // pred_fallthru
          _
        // Predicated region
        $region93: #{forward.1} parent=59 // pred_check
          %p434 = pneg %p239
        $region94: #{forward.1} parent=59 // pred_check_branch
          %436 = sbr.rel (%p434) target = $region96
        $region95: #{forward.1} parent=59 // pred_region
          %437 = dma.done [#allocation15], 16
        $region96: #{forward.1} parent=59 // pred_fallthru
          _
        %p438 = scmp.lt.s32.totalorder %s29, 1
        %s439 = scalar_select %p438, %s29, 1
        %s440 = smul.addr %s439, 3
        %s441 = smul.addr %s440, 4
        %s442 = scalar_lea.vmem %s0, %s441
        %p443 = pneg %p50
        %p444 = pneg %p47
        %p445 = pneg %p71
        %p446 = pneg %p68
        %p447 = pneg %p92
        %p448 = pneg %p89
        %p449 = pneg %p113
        %p450 = pneg %p110
        %p451 = pneg %p134
        %p452 = pneg %p131
        %p453 = pneg %p155
        %p454 = pneg %p152
        %p455 = pneg %p176
        %p456 = pneg %p173
        %p457 = pneg %p197
        %p458 = pneg %p194
        %p459 = pneg %p218
        %p460 = pneg %p215
        %p461 = pneg %p239
        %p462 = pneg %p236
        %p463 = pneg %p265
        %p464 = pneg %p262
        %s465 = sand.u32 %s252, 1
        %s466 = scalar_lea.sflag [#allocation4], %s465
        %s467 = sand.u32 %s252, 1
        %s468 = scalar_lea.vmem [#allocation17], %s467
        %p469 = scmp.lt.s32.totalorder %s29, 1
        %s470 = scalar_select %p469, %s29, 1
        %s471 = smul.addr %s470, 3
        %s472 = smul.addr %s471, 4
        %s473 = scalar_lea.vmem %s0, %s472
        %v474 = vld [vmem:[%s473] sm:$0xff]
        %v475 = vld [vmem:[%s473 + $0x8] sm:$0xf]
        %v476 = vld [vmem:[#allocation2] sm:$0xff]
        %v477 = vld [vmem:[#allocation5] sm:$0xff]
        %v480 = vcombine.high %v474, %v474
        %481 = vrot.lane.b32.xlu0 %v474, 19
        %v482 = vpop.permute.xlu0 %481
        %483 = vrot.lane.b32.xlu0 %v480, 19
        %v484 = vpop.permute.xlu0 %483
        %485 = vrot.lane.b32.xlu0 %v475, 19
        %v486 = vpop.permute.xlu0 %485
        %vm487 = vcmask 154624
        %v488 = vsel %vm487, %v482, %v484
        %v489 = vsel %vm487, %v484, %v486
        %v493 = vsel %vm487, 0.0, %v482
        %vm494 = vcmask 711680
        %v495 = vsel %vm494, %v489, 0.0
        %v498 = vrot.slane %v493, 4
        %v499 = vrot.slane %v488, 4
        %v500 = vrot.slane %v495, 4
        %501 = vrot.lane.b32.xlu0 %v498, 127
        %v502 = vpop.permute.xlu0 %501
        %503 = vrot.lane.b32.xlu0 %v499, 127
        %v504 = vpop.permute.xlu0 %503
        %505 = vrot.lane.b32.xlu0 %v500, 127
        %v506 = vpop.permute.xlu0 %505
        %vm507 = vcmask 1039360
        %v508 = vsel %vm507, %v502, %v504
        %v509 = vsel %vm507, %v504, %v506
        %513 = vrot.lane.b32.xlu0 %v493, 126
        %v514 = vpop.permute.xlu0 %513
        %515 = vrot.lane.b32.xlu0 %v488, 126
        %v516 = vpop.permute.xlu0 %515
        %517 = vrot.lane.b32.xlu0 %v495, 126
        %v518 = vpop.permute.xlu0 %517
        %vm519 = vcmask 1031168
        %v520 = vsel %vm519, %v514, %v516
        %v521 = vsel %vm519, %v516, %v518
        %525 = vrot.lane.b32.xlu0 %v498, 110
        %v526 = vpop.permute.xlu0 %525
        %527 = vrot.lane.b32.xlu0 %v499, 110
        %v528 = vpop.permute.xlu0 %527
        %529 = vrot.lane.b32.xlu0 %v500, 110
        %v530 = vpop.permute.xlu0 %529
        %vm531 = vcmask 900096
        %v532 = vsel %vm531, %v526, %v528
        %v533 = vsel %vm531, %v528, %v530
        %537 = vrot.lane.b32.xlu0 %v493, 109
        %v538 = vpop.permute.xlu0 %537
        %539 = vrot.lane.b32.xlu0 %v488, 109
        %v540 = vpop.permute.xlu0 %539
        %541 = vrot.lane.b32.xlu0 %v495, 109
        %v542 = vpop.permute.xlu0 %541
        %vm543 = vcmask 891904
        %v544 = vsel %vm543, %v538, %v540
        %v545 = vsel %vm543, %v540, %v542
        %549 = vrot.lane.b32.xlu0 %v498, 108
        %v550 = vpop.permute.xlu0 %549
        %551 = vrot.lane.b32.xlu0 %v499, 108
        %v552 = vpop.permute.xlu0 %551
        %553 = vrot.lane.b32.xlu0 %v500, 108
        %v554 = vpop.permute.xlu0 %553
        %vm555 = vcmask 883712
        %v556 = vsel %vm555, %v550, %v552
        %v557 = vsel %vm555, %v552, %v554
        %561 = vrot.lane.b32.xlu0 %v493, 92
        %v562 = vpop.permute.xlu0 %561
        %563 = vrot.lane.b32.xlu0 %v488, 92
        %v564 = vpop.permute.xlu0 %563
        %565 = vrot.lane.b32.xlu0 %v495, 92
        %v566 = vpop.permute.xlu0 %565
        %vm567 = vcmask 752640
        %v568 = vsel %vm567, %v562, %v564
        %v569 = vsel %vm567, %v564, %v566
        %573 = vrot.lane.b32.xlu0 %v498, 91
        %v574 = vpop.permute.xlu0 %573
        %575 = vrot.lane.b32.xlu0 %v499, 91
        %v576 = vpop.permute.xlu0 %575
        %577 = vrot.lane.b32.xlu0 %v500, 91
        %v578 = vpop.permute.xlu0 %577
        %vm579 = vcmask 744448
        %v580 = vsel %vm579, %v574, %v576
        %v581 = vsel %vm579, %v576, %v578
        %585 = vrot.lane.b32.xlu0 %v493, 90
        %v586 = vpop.permute.xlu0 %585
        %587 = vrot.lane.b32.xlu0 %v488, 90
        %v588 = vpop.permute.xlu0 %587
        %589 = vrot.lane.b32.xlu0 %v495, 90
        %v590 = vpop.permute.xlu0 %589
        %vm591 = vcmask 736256
        %v592 = vsel %vm591, %v586, %v588
        %v593 = vsel %vm591, %v588, %v590
        %vm594 = vcmask 1043456
        %v595 = vsel %vm594, %v493, %v508
        %v596 = vsel %vm594, %v488, %v509
        %v597 = vsel %vm594, %v495, %v506
        %v598 = vsel %vm594, %v520, %v532
        %v599 = vsel %vm594, %v521, %v533
        %v600 = vsel %vm594, %v518, %v530
        %v601 = vsel %vm594, %v544, %v556
        %v602 = vsel %vm594, %v545, %v557
        %v603 = vsel %vm594, %v542, %v554
        %v604 = vsel %vm594, %v568, %v580
        %v605 = vsel %vm594, %v569, %v581
        %v606 = vsel %vm594, %v566, %v578
        %608 = vset.pattern.permute.xlu0 0
        %609 = vperm.xlu0 %608, %v477
        %v610 = vpop.permute.xlu0 %609
        %vm612 = vcmask 293888
        %v614 = vsel %vm612, %v476, 0
        %v616 = vsel %vm594, %v592, 0
        %v618 = vsel %vm594, %v593, 0
        %v620 = vsel %vm594, %v590, 0
        %622 = vmatprep.subr.mxu0 %v596
        %623 = vmatpush1.msra.mxu0 %v595
        %624 = vmatprep.subr.mxu0 %v599
        %625 = vmatpush1.msra.mxu0 %v598
        %626 = vmatprep.subr.mxu0 %v602
        %627 = vmatpush1.msra.mxu0 %v601
        %628 = vmatprep.subr.mxu0 %v605
        %629 = vmatpush1.msra.mxu0 %v604
        %630 = vmatprep.subr.mxu0 %v618
        %631 = vmatpush1.msra.mxu0 %v616
        %632 = vmatprep.subr.mxu0 0.0
        %633 = vmatpush1.msra.mxu0 0.0
        %634 = vmatprep.subr.mxu0 0.0
        %635 = vmatpush1.msra.mxu0 0.0
        %636 = vmatprep.subr.mxu0 0.0
        %637 = vmatpush1.msra.mxu0 0.0
        %638 = vmatprep.subr.mxu0 0.0
        %639 = vmatpush1.msra.mxu0 0.0
        %640 = vmatprep.subr.mxu0 0.0
        %641 = vmatpush1.msra.mxu0 0.0
        %642 = vmatprep.subr.mxu0 0.0
        %643 = vmatpush1.msra.mxu0 0.0
        %644 = vmatprep.subr.mxu0 0.0
        %645 = vmatpush1.msra.mxu0 0.0
        %646 = vmatprep.subr.mxu0 0.0
        %647 = vmatpush1.msra.mxu0 0.0
        %648 = vmatprep.subr.mxu0 0.0
        %649 = vmatpush1.msra.mxu0 0.0
        %650 = vmatprep.subr.mxu0 0.0
        %651 = vmatpush1.msra.mxu0 0.0
        %652 = vmatprep.subr.mxu0 0.0
        %653 = vmatpush1.msra.mxu0 0.0
        %654 = vmatprep.subr.mxu0 0.0
        %655 = vmatpush1.msra.mxu0 0.0
        %656 = vmatprep.subr.mxu0 0.0
        %657 = vmatpush1.msra.mxu0 0.0
        %658 = vmatprep.subr.mxu0 0.0
        %659 = vmatpush1.msra.mxu0 0.0
        %660 = vmatprep.subr.mxu0 0.0
        %661 = vmatpush1.msra.mxu0 0.0
        %662 = vmatprep.subr.mxu0 0.0
        %663 = vmatpush1.msra.mxu0 0.0
        %664 = vmatprep.subr.mxu0 0.0
        %665 = vmatpush1.msra.mxu0 0.0
        %666 = vmatprep.subr.mxu0 0.0
        %667 = vmatpush1.msra.mxu0 0.0
        %668 = vmatprep.subr.mxu0 0.0
        %669 = vmatpush1.msra.mxu0 0.0
        %670 = vmatprep.subr.mxu0 0.0
        %671 = vmatpush1.msra.mxu0 0.0
        %672 = vmatprep.subr.mxu0 0.0
        %673 = vmatpush1.msra.mxu0 0.0
        %674 = vmatprep.subr.mxu0 0.0
        %675 = vmatpush1.msra.mxu0 0.0
        %676 = vmatprep.subr.mxu0 0.0
        %677 = vmatpush1.msra.mxu0 0.0
        %678 = vmatprep.subr.mxu0 0.0
        %679 = vmatpush1.msra.mxu0 0.0
        %680 = vmatprep.subr.mxu0 0.0
        %681 = vmatpush1.msra.mxu0 0.0
        %682 = vmatprep.subr.mxu0 0.0
        %683 = vmatpush1.msra.mxu0 0.0
        %684 = vmatprep.subr.mxu0 0.0
        %685 = vmatpush1.msra.mxu0 0.0
        %686 = vmatprep.mubr.f32.mxu0 0.0
        %687 = vmatmul.mubr.f32.gmra.mrb[0].mxu0 %v614
        %v688 = vpop.f32.mrb[0].mxu0
        %v689 = vadd.f32 %v610, %v688
        %v690 = vpop.f32.mrb[0].mxu0
        %v691 = vadd.f32 %v610, %v690
        %692 = vdwg.mxu0
        %693 = vmatprep.subr.mxu0 0.0
        %694 = vmatpush1.msra.mxu0 %v597
        %695 = vmatprep.subr.mxu0 0.0
        %696 = vmatpush1.msra.mxu0 %v600
        %697 = vmatprep.subr.mxu0 0.0
        %698 = vmatpush1.msra.mxu0 %v603
        %699 = vmatprep.subr.mxu0 0.0
        %700 = vmatpush1.msra.mxu0 %v606
        %701 = vmatprep.subr.mxu0 0.0
        %702 = vmatpush1.msra.mxu0 %v620
        %703 = vmatprep.subr.mxu0 0.0
        %704 = vmatpush1.msra.mxu0 0.0
        %705 = vmatprep.subr.mxu0 0.0
        %706 = vmatpush1.msra.mxu0 0.0
        %707 = vmatprep.subr.mxu0 0.0
        %708 = vmatpush1.msra.mxu0 0.0
        %709 = vmatprep.subr.mxu0 0.0
        %710 = vmatpush1.msra.mxu0 0.0
        %711 = vmatprep.subr.mxu0 0.0
        %712 = vmatpush1.msra.mxu0 0.0
        %713 = vmatprep.subr.mxu0 0.0
        %714 = vmatpush1.msra.mxu0 0.0
        %715 = vmatprep.subr.mxu0 0.0
        %716 = vmatpush1.msra.mxu0 0.0
        %717 = vmatprep.subr.mxu0 0.0
        %718 = vmatpush1.msra.mxu0 0.0
        %719 = vmatprep.subr.mxu0 0.0
        %720 = vmatpush1.msra.mxu0 0.0
        %721 = vmatprep.subr.mxu0 0.0
        %722 = vmatpush1.msra.mxu0 0.0
        %723 = vmatprep.subr.mxu0 0.0
        %724 = vmatpush1.msra.mxu0 0.0
        %725 = vmatprep.subr.mxu0 0.0
        %726 = vmatpush1.msra.mxu0 0.0
        %727 = vmatprep.subr.mxu0 0.0
        %728 = vmatpush1.msra.mxu0 0.0
        %729 = vmatprep.subr.mxu0 0.0
        %730 = vmatpush1.msra.mxu0 0.0
        %731 = vmatprep.subr.mxu0 0.0
        %732 = vmatpush1.msra.mxu0 0.0
        %733 = vmatprep.subr.mxu0 0.0
        %734 = vmatpush1.msra.mxu0 0.0
        %735 = vmatprep.subr.mxu0 0.0
        %736 = vmatpush1.msra.mxu0 0.0
        %737 = vmatprep.subr.mxu0 0.0
        %738 = vmatpush1.msra.mxu0 0.0
        %739 = vmatprep.subr.mxu0 0.0
        %740 = vmatpush1.msra.mxu0 0.0
        %741 = vmatprep.subr.mxu0 0.0
        %742 = vmatpush1.msra.mxu0 0.0
        %743 = vmatprep.subr.mxu0 0.0
        %744 = vmatpush1.msra.mxu0 0.0
        %745 = vmatprep.subr.mxu0 0.0
        %746 = vmatpush1.msra.mxu0 0.0
        %747 = vmatprep.subr.mxu0 0.0
        %748 = vmatpush1.msra.mxu0 0.0
        %749 = vmatprep.subr.mxu0 0.0
        %750 = vmatpush1.msra.mxu0 0.0
        %751 = vmatprep.subr.mxu0 0.0
        %752 = vmatpush1.msra.mxu0 0.0
        %753 = vmatprep.subr.mxu0 0.0
        %754 = vmatpush1.msra.mxu0 0.0
        %755 = vmatprep.subr.mxu0 0.0
        %756 = vmatpush1.msra.mxu0 0.0
        %757 = vmatprep.mubr.f32.mxu0 0.0
        %758 = vmatmul.mubr.f32.gmra.mrb[0].mxu0 %v614
        %v759 = vpop.f32.mrb[0].mxu0
        %v760 = vadd.f32 %v610, %v759
        %v761 = vpop.f32.mrb[0].mxu0
        %762 = vdwg.mxu0
        %v763 = vmax.f32 %v689, 0.0
        %v764 = vmax.f32 %v691, 0.0
        %v765 = vmax.f32 %v760, 0.0
        %v766 = vld [vmem:[#allocation7] sm:$0x7]
        %v768 = vlaneseq
        %v769 = vshrl.u32 %v768, 7
        %v770 = vsub.s32 0, %v769
        %v771 = vrot.slane %v766, %v770
        %v772 = vlaneseq
        %v773 = vshrl.u32 %v772, 7
        %v774 = vsub.s32 1, %v773
        %v775 = vrot.slane %v766, %v774
        %v776 = vlaneseq
        %v777 = vshrl.u32 %v776, 7
        %v778 = vsub.s32 2, %v777
        %v779 = vrot.slane %v766, %v778
        %v783 = vmul.f32 %v763, %v771
        %v784 = vmul.f32 %v764, %v775
        %v785 = vmul.f32 %v765, %v779
        %v786 = vld [vmem:[#allocation8] sm:$0xff]
        %v787 = vld [vmem:[#allocation10] sm:$0xff]
        %791 = vrot.lane.b32.xlu0 %v783, 19
        %v792 = vpop.permute.xlu0 %791
        %793 = vrot.lane.b32.xlu0 %v784, 19
        %v794 = vpop.permute.xlu0 %793
        %795 = vrot.lane.b32.xlu0 %v785, 19
        %v796 = vpop.permute.xlu0 %795
        %v797 = vsel %vm487, %v792, %v794
        %v798 = vsel %vm487, %v794, %v796
        %v802 = vsel %vm487, 0.0, %v792
        %v803 = vsel %vm494, %v798, 0.0
        %806 = vrot.lane.b32.xlu0 %v802, 127
        %v807 = vpop.permute.xlu0 %806
        %808 = vrot.lane.b32.xlu0 %v797, 127
        %v809 = vpop.permute.xlu0 %808
        %810 = vrot.lane.b32.xlu0 %v803, 127
        %v811 = vpop.permute.xlu0 %810
        %v812 = vsel %vm507, %v807, %v809
        %v813 = vsel %vm507, %v809, %v811
        %817 = vrot.lane.b32.xlu0 %v802, 126
        %v818 = vpop.permute.xlu0 %817
        %819 = vrot.lane.b32.xlu0 %v797, 126
        %v820 = vpop.permute.xlu0 %819
        %821 = vrot.lane.b32.xlu0 %v803, 126
        %v822 = vpop.permute.xlu0 %821
        %v823 = vsel %vm519, %v818, %v820
        %v824 = vsel %vm519, %v820, %v822
        %828 = vrot.lane.b32.xlu0 %v802, 110
        %v829 = vpop.permute.xlu0 %828
        %830 = vrot.lane.b32.xlu0 %v797, 110
        %v831 = vpop.permute.xlu0 %830
        %832 = vrot.lane.b32.xlu0 %v803, 110
        %v833 = vpop.permute.xlu0 %832
        %v834 = vsel %vm531, %v829, %v831
        %v835 = vsel %vm531, %v831, %v833
        %839 = vrot.lane.b32.xlu0 %v802, 109
        %v840 = vpop.permute.xlu0 %839
        %841 = vrot.lane.b32.xlu0 %v797, 109
        %v842 = vpop.permute.xlu0 %841
        %843 = vrot.lane.b32.xlu0 %v803, 109
        %v844 = vpop.permute.xlu0 %843
        %v845 = vsel %vm543, %v840, %v842
        %v846 = vsel %vm543, %v842, %v844
        %850 = vrot.lane.b32.xlu0 %v802, 108
        %v851 = vpop.permute.xlu0 %850
        %852 = vrot.lane.b32.xlu0 %v797, 108
        %v853 = vpop.permute.xlu0 %852
        %854 = vrot.lane.b32.xlu0 %v803, 108
        %v855 = vpop.permute.xlu0 %854
        %v856 = vsel %vm555, %v851, %v853
        %v857 = vsel %vm555, %v853, %v855
        %861 = vrot.lane.b32.xlu0 %v802, 92
        %v862 = vpop.permute.xlu0 %861
        %863 = vrot.lane.b32.xlu0 %v797, 92
        %v864 = vpop.permute.xlu0 %863
        %865 = vrot.lane.b32.xlu0 %v803, 92
        %v866 = vpop.permute.xlu0 %865
        %v867 = vsel %vm567, %v862, %v864
        %v868 = vsel %vm567, %v864, %v866
        %872 = vrot.lane.b32.xlu0 %v802, 91
        %v873 = vpop.permute.xlu0 %872
        %874 = vrot.lane.b32.xlu0 %v797, 91
        %v875 = vpop.permute.xlu0 %874
        %876 = vrot.lane.b32.xlu0 %v803, 91
        %v877 = vpop.permute.xlu0 %876
        %v878 = vsel %vm579, %v873, %v875
        %v879 = vsel %vm579, %v875, %v877
        %883 = vrot.lane.b32.xlu0 %v802, 90
        %v884 = vpop.permute.xlu0 %883
        %885 = vrot.lane.b32.xlu0 %v797, 90
        %v886 = vpop.permute.xlu0 %885
        %887 = vrot.lane.b32.xlu0 %v803, 90
        %v888 = vpop.permute.xlu0 %887
        %v889 = vsel %vm591, %v884, %v886
        %v890 = vsel %vm591, %v886, %v888
        %895 = vset.pattern.permute.xlu0 0
        %896 = vperm.xlu0 %895, %v787
        %v897 = vpop.permute.xlu0 %896
        %vm899 = vcmask 588800
        %v901 = vsel %vm899, %v786, 0
        %903 = vmatprep.subr.mxu0 %v797
        %904 = vmatpush1.msra.mxu0 %v802
        %905 = vmatprep.subr.mxu0 %v813
        %906 = vmatpush1.msra.mxu0 %v812
        %907 = vmatprep.subr.mxu0 %v824
        %908 = vmatpush1.msra.mxu0 %v823
        %909 = vmatprep.subr.mxu0 %v835
        %910 = vmatpush1.msra.mxu0 %v834
        %911 = vmatprep.subr.mxu0 %v846
        %912 = vmatpush1.msra.mxu0 %v845
        %913 = vmatprep.subr.mxu0 %v857
        %914 = vmatpush1.msra.mxu0 %v856
        %915 = vmatprep.subr.mxu0 %v868
        %916 = vmatpush1.msra.mxu0 %v867
        %917 = vmatprep.subr.mxu0 %v879
        %918 = vmatpush1.msra.mxu0 %v878
        %919 = vmatprep.subr.mxu0 %v890
        %920 = vmatpush1.msra.mxu0 %v889
        %921 = vmatprep.subr.mxu0 0.0
        %922 = vmatpush1.msra.mxu0 0.0
        %923 = vmatprep.subr.mxu0 0.0
        %924 = vmatpush1.msra.mxu0 0.0
        %925 = vmatprep.subr.mxu0 0.0
        %926 = vmatpush1.msra.mxu0 0.0
        %927 = vmatprep.subr.mxu0 0.0
        %928 = vmatpush1.msra.mxu0 0.0
        %929 = vmatprep.subr.mxu0 0.0
        %930 = vmatpush1.msra.mxu0 0.0
        %931 = vmatprep.subr.mxu0 0.0
        %932 = vmatpush1.msra.mxu0 0.0
        %933 = vmatprep.subr.mxu0 0.0
        %934 = vmatpush1.msra.mxu0 0.0
        %935 = vmatprep.subr.mxu0 0.0
        %936 = vmatpush1.msra.mxu0 0.0
        %937 = vmatprep.subr.mxu0 0.0
        %938 = vmatpush1.msra.mxu0 0.0
        %939 = vmatprep.subr.mxu0 0.0
        %940 = vmatpush1.msra.mxu0 0.0
        %941 = vmatprep.subr.mxu0 0.0
        %942 = vmatpush1.msra.mxu0 0.0
        %943 = vmatprep.subr.mxu0 0.0
        %944 = vmatpush1.msra.mxu0 0.0
        %945 = vmatprep.subr.mxu0 0.0
        %946 = vmatpush1.msra.mxu0 0.0
        %947 = vmatprep.subr.mxu0 0.0
        %948 = vmatpush1.msra.mxu0 0.0
        %949 = vmatprep.subr.mxu0 0.0
        %950 = vmatpush1.msra.mxu0 0.0
        %951 = vmatprep.subr.mxu0 0.0
        %952 = vmatpush1.msra.mxu0 0.0
        %953 = vmatprep.subr.mxu0 0.0
        %954 = vmatpush1.msra.mxu0 0.0
        %955 = vmatprep.subr.mxu0 0.0
        %956 = vmatpush1.msra.mxu0 0.0
        %957 = vmatprep.subr.mxu0 0.0
        %958 = vmatpush1.msra.mxu0 0.0
        %959 = vmatprep.subr.mxu0 0.0
        %960 = vmatpush1.msra.mxu0 0.0
        %961 = vmatprep.subr.mxu0 0.0
        %962 = vmatpush1.msra.mxu0 0.0
        %963 = vmatprep.subr.mxu0 0.0
        %964 = vmatpush1.msra.mxu0 0.0
        %965 = vmatprep.subr.mxu0 0.0
        %966 = vmatpush1.msra.mxu0 0.0
        %967 = vmatprep.mubr.f32.mxu0 0.0
        %968 = vmatmul.mubr.f32.gmra.mrb[0].mxu0 %v901
        %v969 = vpop.f32.mrb[0].mxu0
        %v970 = vadd.f32 %v897, %v969
        %v971 = vpop.f32.mrb[0].mxu0
        %v972 = vadd.f32 %v897, %v971
        %973 = vdwg.mxu0
        %974 = vmatprep.subr.mxu0 0.0
        %975 = vmatpush1.msra.mxu0 %v803
        %976 = vmatprep.subr.mxu0 0.0
        %977 = vmatpush1.msra.mxu0 %v811
        %978 = vmatprep.subr.mxu0 0.0
        %979 = vmatpush1.msra.mxu0 %v822
        %980 = vmatprep.subr.mxu0 0.0
        %981 = vmatpush1.msra.mxu0 %v833
        %982 = vmatprep.subr.mxu0 0.0
        %983 = vmatpush1.msra.mxu0 %v844
        %984 = vmatprep.subr.mxu0 0.0
        %985 = vmatpush1.msra.mxu0 %v855
        %986 = vmatprep.subr.mxu0 0.0
        %987 = vmatpush1.msra.mxu0 %v866
        %988 = vmatprep.subr.mxu0 0.0
        %989 = vmatpush1.msra.mxu0 %v877
        %990 = vmatprep.subr.mxu0 0.0
        %991 = vmatpush1.msra.mxu0 %v888
        %992 = vmatprep.subr.mxu0 0.0
        %993 = vmatpush1.msra.mxu0 0.0
        %994 = vmatprep.subr.mxu0 0.0
        %995 = vmatpush1.msra.mxu0 0.0
        %996 = vmatprep.subr.mxu0 0.0
        %997 = vmatpush1.msra.mxu0 0.0
        %998 = vmatprep.subr.mxu0 0.0
        %999 = vmatpush1.msra.mxu0 0.0
        %1000 = vmatprep.subr.mxu0 0.0
        %1001 = vmatpush1.msra.mxu0 0.0
        %1002 = vmatprep.subr.mxu0 0.0
        %1003 = vmatpush1.msra.mxu0 0.0
        %1004 = vmatprep.subr.mxu0 0.0
        %1005 = vmatpush1.msra.mxu0 0.0
        %1006 = vmatprep.subr.mxu0 0.0
        %1007 = vmatpush1.msra.mxu0 0.0
        %1008 = vmatprep.subr.mxu0 0.0
        %1009 = vmatpush1.msra.mxu0 0.0
        %1010 = vmatprep.subr.mxu0 0.0
        %1011 = vmatpush1.msra.mxu0 0.0
        %1012 = vmatprep.subr.mxu0 0.0
        %1013 = vmatpush1.msra.mxu0 0.0
        %1014 = vmatprep.subr.mxu0 0.0
        %1015 = vmatpush1.msra.mxu0 0.0
        %1016 = vmatprep.subr.mxu0 0.0
        %1017 = vmatpush1.msra.mxu0 0.0
        %1018 = vmatprep.subr.mxu0 0.0
        %1019 = vmatpush1.msra.mxu0 0.0
        %1020 = vmatprep.subr.mxu0 0.0
        %1021 = vmatpush1.msra.mxu0 0.0
        %1022 = vmatprep.subr.mxu0 0.0
        %1023 = vmatpush1.msra.mxu0 0.0
        %1024 = vmatprep.subr.mxu0 0.0
        %1025 = vmatpush1.msra.mxu0 0.0
        %1026 = vmatprep.subr.mxu0 0.0
        %1027 = vmatpush1.msra.mxu0 0.0
        %1028 = vmatprep.subr.mxu0 0.0
        %1029 = vmatpush1.msra.mxu0 0.0
        %1030 = vmatprep.subr.mxu0 0.0
        %1031 = vmatpush1.msra.mxu0 0.0
        %1032 = vmatprep.subr.mxu0 0.0
        %1033 = vmatpush1.msra.mxu0 0.0
        %1034 = vmatprep.subr.mxu0 0.0
        %1035 = vmatpush1.msra.mxu0 0.0
        %1036 = vmatprep.subr.mxu0 0.0
        %1037 = vmatpush1.msra.mxu0 0.0
        %1038 = vmatprep.mubr.f32.mxu0 0.0
        %1039 = vmatmul.mubr.f32.gmra.mrb[0].mxu0 %v901
        %v1040 = vpop.f32.mrb[0].mxu0
        %v1041 = vadd.f32 %v897, %v1040
        %v1042 = vpop.f32.mrb[0].mxu0
        %1043 = vdwg.mxu0
        %v1044 = vmax.f32 %v970, 0.0
        %v1045 = vmax.f32 %v972, 0.0
        %v1046 = vmax.f32 %v1041, 0.0
        %vm1047 = vcmask 556032
        %v1048 = vsel %vm1047, %v1046, 0.0
        %1052 = vrot.lane.b32.xlu0 %v1044, 127
        %v1053 = vpop.permute.xlu0 %1052
        %1054 = vrot.lane.b32.xlu0 %v1045, 127
        %v1055 = vpop.permute.xlu0 %1054
        %1056 = vrot.lane.b32.xlu0 %v1048, 127
        %v1057 = vpop.permute.xlu0 %1056
        %v1058 = vsel %vm507, %v1053, %v1055
        %v1059 = vsel %vm507, %v1055, %v1057
        %v1063 = vmax.f32 %v1044, %v1058
        %v1064 = vmax.f32 %v1045, %v1059
        %v1065 = vmax.f32 %v1048, %v1057
        %1069 = vrot.lane.b32.xlu0 %v1063, 110
        %v1070 = vpop.permute.xlu0 %1069
        %1071 = vrot.lane.b32.xlu0 %v1064, 110
        %v1072 = vpop.permute.xlu0 %1071
        %1073 = vrot.lane.b32.xlu0 %v1065, 110
        %v1074 = vpop.permute.xlu0 %1073
        %v1075 = vsel %vm531, %v1070, %v1072
        %v1076 = vsel %vm531, %v1072, %v1074
        %v1080 = vmax.f32 %v1063, %v1075
        %v1081 = vmax.f32 %v1064, %v1076
        %v1082 = vmax.f32 %v1065, %v1074
        %v1086 = vrot.slane %v1080, 1
        %v1087 = vrot.slane %v1081, 1
        %v1088 = vrot.slane %v1082, 1
        %1089 = vrot.lane.b32.xlu0 %v1086, 68
        %v1090 = vpop.permute.xlu0 %1089
        %1091 = vrot.lane.b32.xlu0 %v1087, 68
        %v1092 = vpop.permute.xlu0 %1091
        %1093 = vrot.lane.b32.xlu0 %v1088, 68
        %v1094 = vpop.permute.xlu0 %1093
        %v1095 = vsel %vm1047, %v1090, %v1092
        %v1096 = vsel %vm1047, %v1092, %v1094
        %v1101 = vrot.slane %v1080, 2
        %v1102 = vrot.slane %v1081, 2
        %v1103 = vrot.slane %v1082, 2
        %1104 = vrot.lane.b32.xlu0 %v1101, 8
        %v1105 = vpop.permute.xlu0 %1104
        %1106 = vrot.lane.b32.xlu0 %v1102, 8
        %v1107 = vpop.permute.xlu0 %1106
        %1108 = vrot.lane.b32.xlu0 %v1103, 8
        %v1109 = vpop.permute.xlu0 %1108
        %vm1110 = vcmask 64512
        %v1111 = vsel %vm1110, %v1105, %v1107
        %v1112 = vsel %vm1110, %v1107, %v1109
        %v1116 = vrot.slane %v1080, 3
        %v1117 = vrot.slane %v1081, 3
        %v1118 = vrot.slane %v1082, 3
        %1119 = vrot.lane.b32.xlu0 %v1116, 76
        %v1120 = vpop.permute.xlu0 %1119
        %1121 = vrot.lane.b32.xlu0 %v1117, 76
        %v1122 = vpop.permute.xlu0 %1121
        %1123 = vrot.lane.b32.xlu0 %v1118, 76
        %v1124 = vpop.permute.xlu0 %1123
        %vm1125 = vcmask 621568
        %v1126 = vsel %vm1125, %v1120, %v1122
        %v1127 = vsel %vm1125, %v1122, %v1124
        %v1132 = vrot.slane %v1080, 4
        %v1133 = vrot.slane %v1081, 4
        %v1134 = vrot.slane %v1082, 4
        %1135 = vrot.lane.b32.xlu0 %v1132, 16
        %v1136 = vpop.permute.xlu0 %1135
        %1137 = vrot.lane.b32.xlu0 %v1133, 16
        %v1138 = vpop.permute.xlu0 %1137
        %1139 = vrot.lane.b32.xlu0 %v1134, 16
        %v1140 = vpop.permute.xlu0 %1139
        %vm1141 = vcmask 130048
        %v1142 = vsel %vm1141, %v1136, %v1138
        %v1143 = vsel %vm1141, %v1138, %v1140
        %v1147 = vrot.slane %v1080, 5
        %v1148 = vrot.slane %v1081, 5
        %v1149 = vrot.slane %v1082, 5
        %1150 = vrot.lane.b32.xlu0 %v1147, 84
        %v1151 = vpop.permute.xlu0 %1150
        %1152 = vrot.lane.b32.xlu0 %v1148, 84
        %v1153 = vpop.permute.xlu0 %1152
        %1154 = vrot.lane.b32.xlu0 %v1149, 84
        %v1155 = vpop.permute.xlu0 %1154
        %vm1156 = vcmask 687104
        %v1157 = vsel %vm1156, %v1151, %v1153
        %v1158 = vsel %vm1156, %v1153, %v1155
        %v1163 = vrot.slane %v1080, 6
        %v1164 = vrot.slane %v1081, 6
        %v1165 = vrot.slane %v1082, 6
        %1166 = vrot.lane.b32.xlu0 %v1163, 24
        %v1167 = vpop.permute.xlu0 %1166
        %1168 = vrot.lane.b32.xlu0 %v1164, 24
        %v1169 = vpop.permute.xlu0 %1168
        %1170 = vrot.lane.b32.xlu0 %v1165, 24
        %v1171 = vpop.permute.xlu0 %1170
        %vm1172 = vcmask 195584
        %v1173 = vsel %vm1172, %v1167, %v1169
        %v1174 = vsel %vm1172, %v1169, %v1171
        %v1178 = vrot.slane %v1080, 7
        %v1179 = vrot.slane %v1081, 7
        %v1180 = vrot.slane %v1082, 7
        %1181 = vrot.lane.b32.xlu0 %v1178, 92
        %v1182 = vpop.permute.xlu0 %1181
        %1183 = vrot.lane.b32.xlu0 %v1179, 92
        %v1184 = vpop.permute.xlu0 %1183
        %1185 = vrot.lane.b32.xlu0 %v1180, 92
        %v1186 = vpop.permute.xlu0 %1185
        %v1187 = vsel %vm567, %v1182, %v1184
        %v1188 = vsel %vm567, %v1184, %v1186
        %v1192 = vsel %vm1047, %v1082, %v1090
        %v1193 = vsel %vm1110, %v1094, %v1105
        %v1194 = vsel %vm1125, %v1112, %v1120
        %v1195 = vsel %vm1141, %v1124, %v1136
        %v1196 = vsel %vm1156, %v1143, %v1151
        %v1197 = vsel %vm1172, %v1155, %v1167
        %v1198 = vsel %vm567, %v1174, %v1182
        %v1199 = vld [vmem:[#allocation11] sm:$0xff]
        %v1200 = vld [vmem:[#allocation11 + $0x8] sm:$0xff]
        %v1201 = vld [vmem:[#allocation11 + $0x10] sm:$0xff]
        %v1202 = vld [vmem:[#allocation11 + $0x18] sm:$0xff]
        %v1203 = vld [vmem:[#allocation11 + $0x20] sm:$0xff]
        %v1204 = vld [vmem:[#allocation11 + $0x28] sm:$0xff]
        %v1205 = vld [vmem:[#allocation11 + $0x30] sm:$0xff]
        %v1206 = vld [vmem:[#allocation11 + $0x38] sm:$0xff]
        %v1207 = vld [vmem:[#allocation11 + $0x40] sm:$0xff]
        %v1208 = vld [vmem:[#allocation11 + $0x48] sm:$0xff]
        %v1209 = vld [vmem:[#allocation11 + $0x50] sm:$0xff]
        %v1210 = vld [vmem:[#allocation11 + $0x58] sm:$0xff]
        %v1211 = vld [vmem:[#allocation11 + $0x60] sm:$0xff]
        %v1212 = vld [vmem:[#allocation11 + $0x68] sm:$0xff]
        %v1213 = vld [vmem:[#allocation11 + $0x70] sm:$0xff]
        %v1214 = vld [vmem:[#allocation11 + $0x78] sm:$0xff]
        %v1215 = vld [vmem:[#allocation11 + $0x80] sm:$0xff]
        %v1216 = vld [vmem:[#allocation11 + $0x88] sm:$0xff]
        %v1217 = vld [vmem:[#allocation11 + $0x90] sm:$0xff]
        %v1218 = vld [vmem:[#allocation11 + $0x98] sm:$0xff]
        %v1219 = vld [vmem:[#allocation11 + $0xa0] sm:$0xff]
        %v1220 = vld [vmem:[#allocation11 + $0xa8] sm:$0xff]
        %v1221 = vld [vmem:[#allocation11 + $0xb0] sm:$0xff]
        %v1222 = vld [vmem:[#allocation11 + $0xb8] sm:$0xff]
        %v1223 = vld [vmem:[#allocation11 + $0xc0] sm:$0xff]
        %v1224 = vld [vmem:[#allocation11 + $0xc8] sm:$0xff]
        %v1225 = vld [vmem:[#allocation11 + $0xd0] sm:$0xff]
        %v1226 = vld [vmem:[#allocation11 + $0xd8] sm:$0xff]
        %v1227 = vld [vmem:[#allocation11 + $0xe0] sm:$0xff]
        %v1228 = vld [vmem:[#allocation11 + $0xe8] sm:$0xff]
        %v1229 = vld [vmem:[#allocation11 + $0xf0] sm:$0xff]
        %v1230 = vld [vmem:[#allocation11 + $0xf8] sm:$0xff]
        %v1231 = vld [vmem:[#allocation11 + $0x100] sm:$0xff]
        %v1232 = vld [vmem:[#allocation11 + $0x108] sm:$0xff]
        %v1233 = vld [vmem:[#allocation11 + $0x110] sm:$0xff]
        %v1234 = vld [vmem:[#allocation11 + $0x118] sm:$0xff]
        %v1235 = vld [vmem:[#allocation11 + $0x120] sm:$0xff]
        %v1236 = vld [vmem:[#allocation11 + $0x128] sm:$0xff]
        %v1237 = vld [vmem:[#allocation11 + $0x130] sm:$0xff]
        %v1238 = vld [vmem:[#allocation11 + $0x138] sm:$0xff]
        %v1239 = vld [vmem:[#allocation11 + $0x140] sm:$0xff]
        %v1240 = vld [vmem:[#allocation11 + $0x148] sm:$0xff]
        %v1241 = vld [vmem:[#allocation11 + $0x150] sm:$0xff]
        %v1242 = vld [vmem:[#allocation11 + $0x158] sm:$0xff]
        %v1243 = vld [vmem:[#allocation11 + $0x160] sm:$0xff]
        %v1244 = vld [vmem:[#allocation11 + $0x168] sm:$0xff]
        %v1245 = vld [vmem:[#allocation11 + $0x170] sm:$0xff]
        %v1246 = vld [vmem:[#allocation11 + $0x178] sm:$0xff]
        %v1247 = vld [vmem:[#allocation11 + $0x180] sm:$0xff]
        %v1248 = vld [vmem:[#allocation11 + $0x188] sm:$0xff]
        %v1249 = vld [vmem:[#allocation11 + $0x190] sm:$0xff]
        %v1250 = vld [vmem:[#allocation11 + $0x198] sm:$0xff]
        %v1251 = vld [vmem:[#allocation11 + $0x1a0] sm:$0xff]
        %v1252 = vld [vmem:[#allocation11 + $0x1a8] sm:$0xff]
        %v1253 = vld [vmem:[#allocation11 + $0x1b0] sm:$0xff]
        %v1254 = vld [vmem:[#allocation11 + $0x1b8] sm:$0xff]
        %v1255 = vld [vmem:[#allocation11 + $0x1c0] sm:$0xff]
        %v1256 = vld [vmem:[#allocation11 + $0x1c8] sm:$0xff]
        %v1257 = vld [vmem:[#allocation11 + $0x1d0] sm:$0xff]
        %v1258 = vld [vmem:[#allocation11 + $0x1d8] sm:$0xff]
        %v1259 = vld [vmem:[#allocation11 + $0x1e0] sm:$0xff]
        %v1260 = vld [vmem:[#allocation11 + $0x1e8] sm:$0xff]
        %v1261 = vld [vmem:[#allocation11 + $0x1f0] sm:$0xff]
        %v1262 = vld [vmem:[#allocation11 + $0x1f8] sm:$0xff]
        %v1263 = vld [vmem:[#allocation11 + $0x200] sm:$0xff]
        %v1264 = vld [vmem:[#allocation11 + $0x208] sm:$0xff]
        %v1265 = vld [vmem:[#allocation11 + $0x210] sm:$0xff]
        %v1266 = vld [vmem:[#allocation11 + $0x218] sm:$0xff]
        %v1267 = vld [vmem:[#allocation11 + $0x220] sm:$0xff]
        %v1268 = vld [vmem:[#allocation11 + $0x228] sm:$0xff]
        %v1269 = vld [vmem:[#allocation11 + $0x230] sm:$0xff]
        %v1270 = vld [vmem:[#allocation11 + $0x238] sm:$0xff]
        %v1271 = vld [vmem:[#allocation11 + $0x240] sm:$0xff]
        %v1272 = vld [vmem:[#allocation11 + $0x248] sm:$0xff]
        %v1273 = vld [vmem:[#allocation11 + $0x250] sm:$0xff]
        %v1274 = vld [vmem:[#allocation11 + $0x258] sm:$0xff]
        %v1275 = vld [vmem:[#allocation11 + $0x260] sm:$0xff]
        %v1276 = vld [vmem:[#allocation11 + $0x268] sm:$0xff]
        %v1277 = vld [vmem:[#allocation11 + $0x270] sm:$0xff]
        %v1278 = vld [vmem:[#allocation11 + $0x278] sm:$0xff]
        %v1279 = vld [vmem:[#allocation11 + $0x280] sm:$0xff]
        %v1280 = vld [vmem:[#allocation11 + $0x288] sm:$0xff]
        %v1281 = vld [vmem:[#allocation11 + $0x290] sm:$0xff]
        %v1282 = vld [vmem:[#allocation11 + $0x298] sm:$0xff]
        %v1283 = vld [vmem:[#allocation11 + $0x2a0] sm:$0xff]
        %v1284 = vld [vmem:[#allocation11 + $0x2a8] sm:$0xff]
        %v1285 = vld [vmem:[#allocation11 + $0x2b0] sm:$0xff]
        %v1286 = vld [vmem:[#allocation11 + $0x2b8] sm:$0xff]
        %v1287 = vld [vmem:[#allocation11 + $0x2c0] sm:$0xff]
        %v1288 = vld [vmem:[#allocation11 + $0x2c8] sm:$0xff]
        %v1289 = vld [vmem:[#allocation11 + $0x2d0] sm:$0xff]
        %v1290 = vld [vmem:[#allocation11 + $0x2d8] sm:$0xff]
        %v1291 = vld [vmem:[#allocation11 + $0x2e0] sm:$0xff]
        %v1292 = vld [vmem:[#allocation11 + $0x2e8] sm:$0xff]
        %v1293 = vld [vmem:[#allocation11 + $0x2f0] sm:$0xff]
        %v1294 = vld [vmem:[#allocation11 + $0x2f8] sm:$0xff]
        %v1295 = vld [vmem:[#allocation11 + $0x300] sm:$0xff]
        %v1296 = vld [vmem:[#allocation11 + $0x308] sm:$0xff]
        %v1297 = vld [vmem:[#allocation11 + $0x310] sm:$0xff]
        %v1298 = vld [vmem:[#allocation11 + $0x318] sm:$0xff]
        %v1299 = vld [vmem:[#allocation11 + $0x320] sm:$0xff]
        %v1300 = vld [vmem:[#allocation11 + $0x328] sm:$0xff]
        %v1301 = vld [vmem:[#allocation11 + $0x330] sm:$0xff]
        %v1302 = vld [vmem:[#allocation11 + $0x338] sm:$0xff]
        %v1303 = vld [vmem:[#allocation11 + $0x340] sm:$0xff]
        %v1304 = vld [vmem:[#allocation11 + $0x348] sm:$0xff]
        %v1305 = vld [vmem:[#allocation11 + $0x350] sm:$0xff]
        %v1306 = vld [vmem:[#allocation11 + $0x358] sm:$0xff]
        %v1307 = vld [vmem:[#allocation11 + $0x360] sm:$0xff]
        %v1308 = vld [vmem:[#allocation11 + $0x368] sm:$0xff]
        %v1309 = vld [vmem:[#allocation11 + $0x370] sm:$0xff]
        %v1310 = vld [vmem:[#allocation11 + $0x378] sm:$0xff]
        %v1311 = vld [vmem:[#allocation11 + $0x380] sm:$0xff]
        %v1312 = vld [vmem:[#allocation11 + $0x388] sm:$0xff]
        %v1313 = vld [vmem:[#allocation11 + $0x390] sm:$0xff]
        %v1314 = vld [vmem:[#allocation11 + $0x398] sm:$0xff]
        %v1315 = vld [vmem:[#allocation11 + $0x3a0] sm:$0xff]
        %v1316 = vld [vmem:[#allocation11 + $0x3a8] sm:$0xff]
        %v1317 = vld [vmem:[#allocation11 + $0x3b0] sm:$0xff]
        %v1318 = vld [vmem:[#allocation11 + $0x3b8] sm:$0xff]
        %v1319 = vld [vmem:[#allocation11 + $0x3c0] sm:$0xff]
        %v1320 = vld [vmem:[#allocation11 + $0x3c8] sm:$0xff]
        %v1321 = vld [vmem:[#allocation11 + $0x3d0] sm:$0xff]
        %v1322 = vld [vmem:[#allocation11 + $0x3d8] sm:$0xff]
        %v1323 = vld [vmem:[#allocation11 + $0x3e0] sm:$0xff]
        %v1324 = vld [vmem:[#allocation11 + $0x3e8] sm:$0xff]
        %v1325 = vld [vmem:[#allocation11 + $0x3f0] sm:$0xff]
        %v1326 = vld [vmem:[#allocation11 + $0x3f8] sm:$0xff]
        %v1327 = vld [vmem:[#allocation11 + $0x400] sm:$0xff]
        %v1328 = vld [vmem:[#allocation11 + $0x408] sm:$0xff]
        %v1329 = vld [vmem:[#allocation11 + $0x410] sm:$0xff]
        %v1330 = vld [vmem:[#allocation11 + $0x418] sm:$0xff]
        %v1331 = vld [vmem:[#allocation11 + $0x420] sm:$0xff]
        %v1332 = vld [vmem:[#allocation11 + $0x428] sm:$0xff]
        %v1333 = vld [vmem:[#allocation11 + $0x430] sm:$0xff]
        %v1334 = vld [vmem:[#allocation11 + $0x438] sm:$0xff]
        %v1335 = vld [vmem:[#allocation11 + $0x440] sm:$0xff]
        %v1336 = vld [vmem:[#allocation11 + $0x448] sm:$0xff]
        %v1337 = vld [vmem:[#allocation11 + $0x450] sm:$0xff]
        %v1338 = vld [vmem:[#allocation11 + $0x458] sm:$0xff]
        %v1339 = vld [vmem:[#allocation11 + $0x460] sm:$0xff]
        %v1340 = vld [vmem:[#allocation11 + $0x468] sm:$0xff]
        %v1341 = vld [vmem:[#allocation11 + $0x470] sm:$0xff]
        %v1342 = vld [vmem:[#allocation11 + $0x478] sm:$0xff]
        %v1343 = vld [vmem:[#allocation11 + $0x480] sm:$0xff]
        %v1344 = vld [vmem:[#allocation11 + $0x488] sm:$0xff]
        %v1345 = vld [vmem:[#allocation11 + $0x490] sm:$0xff]
        %v1346 = vld [vmem:[#allocation11 + $0x498] sm:$0xff]
        %v1347 = vld [vmem:[#allocation11 + $0x4a0] sm:$0xff]
        %v1348 = vld [vmem:[#allocation11 + $0x4a8] sm:$0xff]
        %v1349 = vld [vmem:[#allocation11 + $0x4b0] sm:$0xff]
        %v1350 = vld [vmem:[#allocation11 + $0x4b8] sm:$0xff]
        %v1351 = vld [vmem:[#allocation11 + $0x4c0] sm:$0xff]
        %v1352 = vld [vmem:[#allocation11 + $0x4c8] sm:$0xff]
        %v1353 = vld [vmem:[#allocation11 + $0x4d0] sm:$0xff]
        %v1354 = vld [vmem:[#allocation11 + $0x4d8] sm:$0xff]
        %v1355 = vld [vmem:[#allocation11 + $0x4e0] sm:$0xff]
        %v1356 = vld [vmem:[#allocation11 + $0x4e8] sm:$0xff]
        %v1357 = vld [vmem:[#allocation11 + $0x4f0] sm:$0xff]
        %v1358 = vld [vmem:[#allocation11 + $0x4f8] sm:$0xff]
        %v1359 = vld [vmem:[#allocation11 + $0x500] sm:$0xff]
        %v1360 = vld [vmem:[#allocation11 + $0x508] sm:$0xff]
        %v1361 = vld [vmem:[#allocation11 + $0x510] sm:$0xff]
        %v1362 = vld [vmem:[#allocation11 + $0x518] sm:$0xff]
        %v1363 = vld [vmem:[#allocation11 + $0x520] sm:$0xff]
        %v1364 = vld [vmem:[#allocation11 + $0x528] sm:$0xff]
        %v1365 = vld [vmem:[#allocation11 + $0x530] sm:$0xff]
        %v1366 = vld [vmem:[#allocation11 + $0x538] sm:$0xff]
        %v1367 = vld [vmem:[#allocation11 + $0x540] sm:$0xff]
        %v1368 = vld [vmem:[#allocation11 + $0x548] sm:$0xff]
        %v1369 = vld [vmem:[#allocation11 + $0x550] sm:$0xff]
        %v1370 = vld [vmem:[#allocation11 + $0x558] sm:$0xff]
        %v1371 = vld [vmem:[#allocation11 + $0x560] sm:$0xff]
        %v1372 = vld [vmem:[#allocation11 + $0x568] sm:$0xff]
        %v1373 = vld [vmem:[#allocation11 + $0x570] sm:$0xff]
        %v1374 = vld [vmem:[#allocation11 + $0x578] sm:$0xff]
        %v1375 = vld [vmem:[#allocation11 + $0x580] sm:$0xff]
        %v1376 = vld [vmem:[#allocation11 + $0x588] sm:$0xff]
        %v1377 = vld [vmem:[#allocation11 + $0x590] sm:$0xff]
        %v1378 = vld [vmem:[#allocation11 + $0x598] sm:$0xff]
        %v1379 = vld [vmem:[#allocation11 + $0x5a0] sm:$0xff]
        %v1380 = vld [vmem:[#allocation11 + $0x5a8] sm:$0xff]
        %v1381 = vld [vmem:[#allocation11 + $0x5b0] sm:$0xff]
        %v1382 = vld [vmem:[#allocation11 + $0x5b8] sm:$0xff]
        %v1383 = vld [vmem:[#allocation11 + $0x5c0] sm:$0xff]
        %v1384 = vld [vmem:[#allocation11 + $0x5c8] sm:$0xff]
        %v1385 = vld [vmem:[#allocation11 + $0x5d0] sm:$0xff]
        %v1386 = vld [vmem:[#allocation11 + $0x5d8] sm:$0xff]
        %v1387 = vld [vmem:[#allocation11 + $0x5e0] sm:$0xff]
        %v1388 = vld [vmem:[#allocation11 + $0x5e8] sm:$0xff]
        %v1389 = vld [vmem:[#allocation11 + $0x5f0] sm:$0xff]
        %v1390 = vld [vmem:[#allocation11 + $0x5f8] sm:$0xff]
        %v1391 = vld [vmem:[#allocation11 + $0x600] sm:$0xff]
        %v1392 = vld [vmem:[#allocation11 + $0x608] sm:$0xff]
        %v1393 = vld [vmem:[#allocation11 + $0x610] sm:$0xff]
        %v1394 = vld [vmem:[#allocation11 + $0x618] sm:$0xff]
        %v1395 = vld [vmem:[#allocation11 + $0x620] sm:$0xff]
        %v1396 = vld [vmem:[#allocation11 + $0x628] sm:$0xff]
        %v1397 = vld [vmem:[#allocation11 + $0x630] sm:$0xff]
        %v1398 = vld [vmem:[#allocation11 + $0x638] sm:$0xff]
        %v1399 = vld [vmem:[#allocation11 + $0x640] sm:$0xff]
        %v1400 = vld [vmem:[#allocation11 + $0x648] sm:$0xff]
        %v1401 = vld [vmem:[#allocation11 + $0x650] sm:$0xff]
        %v1402 = vld [vmem:[#allocation11 + $0x658] sm:$0xff]
        %v1403 = vld [vmem:[#allocation11 + $0x660] sm:$0xff]
        %v1404 = vld [vmem:[#allocation11 + $0x668] sm:$0xff]
        %v1405 = vld [vmem:[#allocation11 + $0x670] sm:$0xff]
        %v1406 = vld [vmem:[#allocation11 + $0x678] sm:$0xff]
        %v1407 = vld [vmem:[#allocation11 + $0x680] sm:$0xff]
        %v1408 = vld [vmem:[#allocation11 + $0x688] sm:$0xff]
        %v1409 = vld [vmem:[#allocation11 + $0x690] sm:$0xff]
        %v1410 = vld [vmem:[#allocation11 + $0x698] sm:$0xff]
        %v1411 = vld [vmem:[#allocation11 + $0x6a0] sm:$0xff]
        %v1412 = vld [vmem:[#allocation11 + $0x6a8] sm:$0xff]
        %v1413 = vld [vmem:[#allocation11 + $0x6b0] sm:$0xff]
        %v1414 = vld [vmem:[#allocation11 + $0x6b8] sm:$0xff]
        %v1415 = vld [vmem:[#allocation11 + $0x6c0] sm:$0xff]
        %v1416 = vld [vmem:[#allocation11 + $0x6c8] sm:$0xff]
        %v1417 = vld [vmem:[#allocation11 + $0x6d0] sm:$0xff]
        %v1418 = vld [vmem:[#allocation11 + $0x6d8] sm:$0xff]
        %v1419 = vld [vmem:[#allocation11 + $0x6e0] sm:$0xff]
        %v1420 = vld [vmem:[#allocation11 + $0x6e8] sm:$0xff]
        %v1421 = vld [vmem:[#allocation11 + $0x6f0] sm:$0xff]
        %v1422 = vld [vmem:[#allocation11 + $0x6f8] sm:$0xff]
        %v1423 = vld [vmem:[#allocation11 + $0x700] sm:$0xff]
        %v1424 = vld [vmem:[#allocation11 + $0x708] sm:$0xff]
        %v1425 = vld [vmem:[#allocation11 + $0x710] sm:$0xff]
        %v1426 = vld [vmem:[#allocation11 + $0x718] sm:$0xff]
        %v1427 = vld [vmem:[#allocation11 + $0x720] sm:$0xff]
        %v1428 = vld [vmem:[#allocation11 + $0x728] sm:$0xff]
        %v1429 = vld [vmem:[#allocation11 + $0x730] sm:$0xff]
        %v1430 = vld [vmem:[#allocation11 + $0x738] sm:$0xff]
        %v1431 = vld [vmem:[#allocation11 + $0x740] sm:$0xff]
        %v1432 = vld [vmem:[#allocation11 + $0x748] sm:$0xff]
        %v1433 = vld [vmem:[#allocation11 + $0x750] sm:$0xff]
        %v1434 = vld [vmem:[#allocation11 + $0x758] sm:$0xff]
        %v1435 = vld [vmem:[#allocation11 + $0x760] sm:$0xff]
        %v1436 = vld [vmem:[#allocation11 + $0x768] sm:$0xff]
        %v1437 = vld [vmem:[#allocation11 + $0x770] sm:$0xff]
        %v1438 = vld [vmem:[#allocation11 + $0x778] sm:$0xff]
        %v1439 = vld [vmem:[#allocation11 + $0x780] sm:$0xff]
        %v1440 = vld [vmem:[#allocation11 + $0x788] sm:$0xff]
        %v1441 = vld [vmem:[#allocation11 + $0x790] sm:$0xff]
        %v1442 = vld [vmem:[#allocation11 + $0x798] sm:$0xff]
        %v1443 = vld [vmem:[#allocation11 + $0x7a0] sm:$0xff]
        %v1444 = vld [vmem:[#allocation11 + $0x7a8] sm:$0xff]
        %v1445 = vld [vmem:[#allocation11 + $0x7b0] sm:$0xff]
        %v1446 = vld [vmem:[#allocation11 + $0x7b8] sm:$0xff]
        %v1447 = vld [vmem:[#allocation11 + $0x7c0] sm:$0xff]
        %v1448 = vld [vmem:[#allocation11 + $0x7c8] sm:$0xff]
        %v1449 = vld [vmem:[#allocation11 + $0x7d0] sm:$0xff]
        %v1450 = vld [vmem:[#allocation11 + $0x7d8] sm:$0xff]
        %v1451 = vld [vmem:[#allocation11 + $0x7e0] sm:$0xff]
        %v1452 = vld [vmem:[#allocation11 + $0x7e8] sm:$0xff]
        %v1453 = vld [vmem:[#allocation11 + $0x7f0] sm:$0xff]
        %v1454 = vld [vmem:[#allocation11 + $0x7f8] sm:$0xff]
        %v1455 = vld [vmem:[#allocation11 + $0x800] sm:$0xff]
        %v1456 = vld [vmem:[#allocation11 + $0x808] sm:$0xff]
        %v1457 = vld [vmem:[#allocation11 + $0x810] sm:$0xff]
        %v1458 = vld [vmem:[#allocation11 + $0x818] sm:$0xff]
        %v1459 = vld [vmem:[#allocation11 + $0x820] sm:$0xff]
        %v1460 = vld [vmem:[#allocation11 + $0x828] sm:$0xff]
        %v1461 = vld [vmem:[#allocation11 + $0x830] sm:$0xff]
        %v1462 = vld [vmem:[#allocation11 + $0x838] sm:$0xff]
        %v1463 = vld [vmem:[#allocation11 + $0x840] sm:$0xff]
        %v1464 = vld [vmem:[#allocation11 + $0x848] sm:$0xff]
        %v1465 = vld [vmem:[#allocation11 + $0x850] sm:$0xff]
        %v1466 = vld [vmem:[#allocation11 + $0x858] sm:$0xff]
        %v1467 = vld [vmem:[#allocation11 + $0x860] sm:$0xff]
        %v1468 = vld [vmem:[#allocation11 + $0x868] sm:$0xff]
        %v1469 = vld [vmem:[#allocation11 + $0x870] sm:$0xff]
        %v1470 = vld [vmem:[#allocation11 + $0x878] sm:$0xff]
        %v1471 = vld [vmem:[#allocation11 + $0x880] sm:$0xff]
        %v1472 = vld [vmem:[#allocation11 + $0x888] sm:$0xff]
        %v1473 = vld [vmem:[#allocation11 + $0x890] sm:$0xff]
        %v1474 = vld [vmem:[#allocation11 + $0x898] sm:$0xff]
        %v1475 = vld [vmem:[#allocation11 + $0x8a0] sm:$0xff]
        %v1476 = vld [vmem:[#allocation11 + $0x8a8] sm:$0xff]
        %v1477 = vld [vmem:[#allocation11 + $0x8b0] sm:$0xff]
        %v1478 = vld [vmem:[#allocation11 + $0x8b8] sm:$0xff]
        %v1479 = vld [vmem:[#allocation11 + $0x8c0] sm:$0xff]
        %v1480 = vld [vmem:[#allocation11 + $0x8c8] sm:$0xff]
        %v1481 = vld [vmem:[#allocation11 + $0x8d0] sm:$0xff]
        %v1482 = vld [vmem:[#allocation11 + $0x8d8] sm:$0xff]
        %v1483 = vld [vmem:[#allocation11 + $0x8e0] sm:$0xff]
        %v1484 = vld [vmem:[#allocation11 + $0x8e8] sm:$0xff]
        %v1485 = vld [vmem:[#allocation11 + $0x8f0] sm:$0xff]
        %v1486 = vld [vmem:[#allocation11 + $0x8f8] sm:$0xff]
        %v1487 = vld [vmem:[#allocation11 + $0x900] sm:$0xff]
        %v1488 = vld [vmem:[#allocation11 + $0x908] sm:$0xff]
        %v1489 = vld [vmem:[#allocation11 + $0x910] sm:$0xff]
        %v1490 = vld [vmem:[#allocation11 + $0x918] sm:$0xff]
        %v1491 = vld [vmem:[#allocation11 + $0x920] sm:$0xff]
        %v1492 = vld [vmem:[#allocation11 + $0x928] sm:$0xff]
        %v1493 = vld [vmem:[#allocation11 + $0x930] sm:$0xff]
        %v1494 = vld [vmem:[#allocation11 + $0x938] sm:$0xff]
        %v1495 = vld [vmem:[#allocation11 + $0x940] sm:$0xff]
        %v1496 = vld [vmem:[#allocation11 + $0x948] sm:$0xff]
        %v1497 = vld [vmem:[#allocation11 + $0x950] sm:$0xff]
        %v1498 = vld [vmem:[#allocation11 + $0x958] sm:$0xff]
        %v1499 = vld [vmem:[#allocation11 + $0x960] sm:$0xff]
        %v1500 = vld [vmem:[#allocation11 + $0x968] sm:$0xff]
        %v1501 = vld [vmem:[#allocation11 + $0x970] sm:$0xff]
        %v1502 = vld [vmem:[#allocation11 + $0x978] sm:$0xff]
        %v1503 = vld [vmem:[#allocation11 + $0x980] sm:$0xff]
        %v1504 = vld [vmem:[#allocation11 + $0x988] sm:$0xff]
        %v1505 = vld [vmem:[#allocation11 + $0x990] sm:$0xff]
        %v1506 = vld [vmem:[#allocation11 + $0x998] sm:$0xff]
        %v1507 = vld [vmem:[#allocation11 + $0x9a0] sm:$0xff]
        %v1508 = vld [vmem:[#allocation11 + $0x9a8] sm:$0xff]
        %v1509 = vld [vmem:[#allocation11 + $0x9b0] sm:$0xff]
        %v1510 = vld [vmem:[#allocation11 + $0x9b8] sm:$0xff]
        %v1511 = vld [vmem:[#allocation11 + $0x9c0] sm:$0xff]
        %v1512 = vld [vmem:[#allocation11 + $0x9c8] sm:$0xff]
        %v1513 = vld [vmem:[#allocation11 + $0x9d0] sm:$0xff]
        %v1514 = vld [vmem:[#allocation11 + $0x9d8] sm:$0xff]
        %v1515 = vld [vmem:[#allocation11 + $0x9e0] sm:$0xff]
        %v1516 = vld [vmem:[#allocation11 + $0x9e8] sm:$0xff]
        %v1517 = vld [vmem:[#allocation11 + $0x9f0] sm:$0xff]
        %v1518 = vld [vmem:[#allocation11 + $0x9f8] sm:$0xff]
        %v1519 = vld [vmem:[#allocation11 + $0xa00] sm:$0xff]
        %v1520 = vld [vmem:[#allocation11 + $0xa08] sm:$0xff]
        %v1521 = vld [vmem:[#allocation11 + $0xa10] sm:$0xff]
        %v1522 = vld [vmem:[#allocation11 + $0xa18] sm:$0xff]
        %v1523 = vld [vmem:[#allocation13] sm:$0x1]
        %vm1524 = vcmask 261120
        %v1525 = vsel %vm1524, %v1186, 0
        %1527 = vmatprep.subr.mxu0 0.0
        %1528 = vmatpush1.msra.mxu0 %v1199
        %1529 = vmatprep.subr.mxu0 0.0
        %1530 = vmatpush1.msra.mxu0 %v1200
        %1531 = vmatprep.subr.mxu0 0.0
        %1532 = vmatpush1.msra.mxu0 %v1201
        %1533 = vmatprep.subr.mxu0 0.0
        %1534 = vmatpush1.msra.mxu0 %v1202
        %1535 = vmatprep.subr.mxu0 0.0
        %1536 = vmatpush1.msra.mxu0 %v1203
        %1537 = vmatprep.subr.mxu0 0.0
        %1538 = vmatpush1.msra.mxu0 %v1204
        %1539 = vmatprep.subr.mxu0 0.0
        %1540 = vmatpush1.msra.mxu0 %v1205
        %1541 = vmatprep.subr.mxu0 0.0
        %1542 = vmatpush1.msra.mxu0 %v1206
        %1543 = vmatprep.subr.mxu0 0.0
        %1544 = vmatpush1.msra.mxu0 %v1207
        %1545 = vmatprep.subr.mxu0 0.0
        %1546 = vmatpush1.msra.mxu0 %v1208
        %1547 = vmatprep.subr.mxu0 0.0
        %1548 = vmatpush1.msra.mxu0 %v1209
        %1549 = vmatprep.subr.mxu0 0.0
        %1550 = vmatpush1.msra.mxu0 %v1210
        %1551 = vmatprep.subr.mxu0 0.0
        %1552 = vmatpush1.msra.mxu0 %v1211
        %1553 = vmatprep.subr.mxu0 0.0
        %1554 = vmatpush1.msra.mxu0 %v1212
        %1555 = vmatprep.subr.mxu0 0.0
        %1556 = vmatpush1.msra.mxu0 %v1213
        %1557 = vmatprep.subr.mxu0 0.0
        %1558 = vmatpush1.msra.mxu0 %v1214
        %1559 = vmatprep.subr.mxu0 0.0
        %1560 = vmatpush1.msra.mxu0 %v1215
        %1561 = vmatprep.subr.mxu0 0.0
        %1562 = vmatpush1.msra.mxu0 %v1216
        %1563 = vmatprep.subr.mxu0 0.0
        %1564 = vmatpush1.msra.mxu0 %v1217
        %1565 = vmatprep.subr.mxu0 0.0
        %1566 = vmatpush1.msra.mxu0 %v1218
        %1567 = vmatprep.subr.mxu0 0.0
        %1568 = vmatpush1.msra.mxu0 %v1219
        %1569 = vmatprep.subr.mxu0 0.0
        %1570 = vmatpush1.msra.mxu0 %v1220
        %1571 = vmatprep.subr.mxu0 0.0
        %1572 = vmatpush1.msra.mxu0 %v1221
        %1573 = vmatprep.subr.mxu0 0.0
        %1574 = vmatpush1.msra.mxu0 %v1222
        %1575 = vmatprep.subr.mxu0 0.0
        %1576 = vmatpush1.msra.mxu0 %v1223
        %1577 = vmatprep.subr.mxu0 0.0
        %1578 = vmatpush1.msra.mxu0 %v1224
        %1579 = vmatprep.subr.mxu0 0.0
        %1580 = vmatpush1.msra.mxu0 %v1225
        %1581 = vmatprep.subr.mxu0 0.0
        %1582 = vmatpush1.msra.mxu0 %v1226
        %1583 = vmatprep.subr.mxu0 0.0
        %1584 = vmatpush1.msra.mxu0 %v1227
        %1585 = vmatprep.subr.mxu0 0.0
        %1586 = vmatpush1.msra.mxu0 %v1228
        %1587 = vmatprep.subr.mxu0 0.0
        %1588 = vmatpush1.msra.mxu0 %v1229
        %1589 = vmatprep.subr.mxu0 0.0
        %1590 = vmatpush1.msra.mxu0 %v1230
        %1591 = vmatprep.mubr.f32.mxu0 %v1081
        %1592 = vmatmul.mubr.f32.gmra.mrb[0].mxu0 %v1080
        %v1593 = vpop.f32.mrb[0].mxu0
        %v1594 = vadd.f32 %v1523, %v1593
        %v1595 = vpop.f32.mrb[0].mxu0
        %1596 = vdwg.mxu0
        %1597 = vmatprep.subr.mxu0 0.0
        %1598 = vmatpush1.msra.mxu0 %v1231
        %1599 = vmatprep.subr.mxu0 0.0
        %1600 = vmatpush1.msra.mxu0 %v1232
        %1601 = vmatprep.subr.mxu0 0.0
        %1602 = vmatpush1.msra.mxu0 %v1233
        %1603 = vmatprep.subr.mxu0 0.0
        %1604 = vmatpush1.msra.mxu0 %v1234
        %1605 = vmatprep.subr.mxu0 0.0
        %1606 = vmatpush1.msra.mxu0 %v1235
        %1607 = vmatprep.subr.mxu0 0.0
        %1608 = vmatpush1.msra.mxu0 %v1236
        %1609 = vmatprep.subr.mxu0 0.0
        %1610 = vmatpush1.msra.mxu0 %v1237
        %1611 = vmatprep.subr.mxu0 0.0
        %1612 = vmatpush1.msra.mxu0 %v1238
        %1613 = vmatprep.subr.mxu0 0.0
        %1614 = vmatpush1.msra.mxu0 %v1239
        %1615 = vmatprep.subr.mxu0 0.0
        %1616 = vmatpush1.msra.mxu0 %v1240
        %1617 = vmatprep.subr.mxu0 0.0
        %1618 = vmatpush1.msra.mxu0 %v1241
        %1619 = vmatprep.subr.mxu0 0.0
        %1620 = vmatpush1.msra.mxu0 %v1242
        %1621 = vmatprep.subr.mxu0 0.0
        %1622 = vmatpush1.msra.mxu0 %v1243
        %1623 = vmatprep.subr.mxu0 0.0
        %1624 = vmatpush1.msra.mxu0 %v1244
        %1625 = vmatprep.subr.mxu0 0.0
        %1626 = vmatpush1.msra.mxu0 %v1245
        %1627 = vmatprep.subr.mxu0 0.0
        %1628 = vmatpush1.msra.mxu0 %v1246
        %1629 = vmatprep.subr.mxu0 0.0
        %1630 = vmatpush1.msra.mxu0 %v1247
        %1631 = vmatprep.subr.mxu0 0.0
        %1632 = vmatpush1.msra.mxu0 %v1248
        %1633 = vmatprep.subr.mxu0 0.0
        %1634 = vmatpush1.msra.mxu0 %v1249
        %1635 = vmatprep.subr.mxu0 0.0
        %1636 = vmatpush1.msra.mxu0 %v1250
        %1637 = vmatprep.subr.mxu0 0.0
        %1638 = vmatpush1.msra.mxu0 %v1251
        %1639 = vmatprep.subr.mxu0 0.0
        %1640 = vmatpush1.msra.mxu0 %v1252
        %1641 = vmatprep.subr.mxu0 0.0
        %1642 = vmatpush1.msra.mxu0 %v1253
        %1643 = vmatprep.subr.mxu0 0.0
        %1644 = vmatpush1.msra.mxu0 %v1254
        %1645 = vmatprep.subr.mxu0 0.0
        %1646 = vmatpush1.msra.mxu0 %v1255
        %1647 = vmatprep.subr.mxu0 0.0
        %1648 = vmatpush1.msra.mxu0 %v1256
        %1649 = vmatprep.subr.mxu0 0.0
        %1650 = vmatpush1.msra.mxu0 %v1257
        %1651 = vmatprep.subr.mxu0 0.0
        %1652 = vmatpush1.msra.mxu0 %v1258
        %1653 = vmatprep.subr.mxu0 0.0
        %1654 = vmatpush1.msra.mxu0 %v1259
        %1655 = vmatprep.subr.mxu0 0.0
        %1656 = vmatpush1.msra.mxu0 %v1260
        %1657 = vmatprep.subr.mxu0 0.0
        %1658 = vmatpush1.msra.mxu0 %v1261
        %1659 = vmatprep.subr.mxu0 0.0
        %1660 = vmatpush1.msra.mxu0 %v1262
        %1661 = vmatprep.mubr.f32.mxu0 %v1095
        %1662 = vmatmul.mubr.f32.gmra.mrb[0].mxu0 %v1192
        %v1663 = vpop.f32.mrb[0].mxu0
        %v1664 = vadd.f32 %v1594, %v1663
        %v1665 = vpop.f32.mrb[0].mxu0
        %1666 = vdwg.mxu0
        %1667 = vmatprep.subr.mxu0 0.0
        %1668 = vmatpush1.msra.mxu0 %v1263
        %1669 = vmatprep.subr.mxu0 0.0
        %1670 = vmatpush1.msra.mxu0 %v1264
        %1671 = vmatprep.subr.mxu0 0.0
        %1672 = vmatpush1.msra.mxu0 %v1265
        %1673 = vmatprep.subr.mxu0 0.0
        %1674 = vmatpush1.msra.mxu0 %v1266
        %1675 = vmatprep.subr.mxu0 0.0
        %1676 = vmatpush1.msra.mxu0 %v1267
        %1677 = vmatprep.subr.mxu0 0.0
        %1678 = vmatpush1.msra.mxu0 %v1268
        %1679 = vmatprep.subr.mxu0 0.0
        %1680 = vmatpush1.msra.mxu0 %v1269
        %1681 = vmatprep.subr.mxu0 0.0
        %1682 = vmatpush1.msra.mxu0 %v1270
        %1683 = vmatprep.subr.mxu0 0.0
        %1684 = vmatpush1.msra.mxu0 %v1271
        %1685 = vmatprep.subr.mxu0 0.0
        %1686 = vmatpush1.msra.mxu0 %v1272
        %1687 = vmatprep.subr.mxu0 0.0
        %1688 = vmatpush1.msra.mxu0 %v1273
        %1689 = vmatprep.subr.mxu0 0.0
        %1690 = vmatpush1.msra.mxu0 %v1274
        %1691 = vmatprep.subr.mxu0 0.0
        %1692 = vmatpush1.msra.mxu0 %v1275
        %1693 = vmatprep.subr.mxu0 0.0
        %1694 = vmatpush1.msra.mxu0 %v1276
        %1695 = vmatprep.subr.mxu0 0.0
        %1696 = vmatpush1.msra.mxu0 %v1277
        %1697 = vmatprep.subr.mxu0 0.0
        %1698 = vmatpush1.msra.mxu0 %v1278
        %1699 = vmatprep.subr.mxu0 0.0
        %1700 = vmatpush1.msra.mxu0 %v1279
        %1701 = vmatprep.subr.mxu0 0.0
        %1702 = vmatpush1.msra.mxu0 %v1280
        %1703 = vmatprep.subr.mxu0 0.0
        %1704 = vmatpush1.msra.mxu0 %v1281
        %1705 = vmatprep.subr.mxu0 0.0
        %1706 = vmatpush1.msra.mxu0 %v1282
        %1707 = vmatprep.subr.mxu0 0.0
        %1708 = vmatpush1.msra.mxu0 %v1283
        %1709 = vmatprep.subr.mxu0 0.0
        %1710 = vmatpush1.msra.mxu0 %v1284
        %1711 = vmatprep.subr.mxu0 0.0
        %1712 = vmatpush1.msra.mxu0 %v1285
        %1713 = vmatprep.subr.mxu0 0.0
        %1714 = vmatpush1.msra.mxu0 %v1286
        %1715 = vmatprep.subr.mxu0 0.0
        %1716 = vmatpush1.msra.mxu0 %v1287
        %1717 = vmatprep.subr.mxu0 0.0
        %1718 = vmatpush1.msra.mxu0 %v1288
        %1719 = vmatprep.subr.mxu0 0.0
        %1720 = vmatpush1.msra.mxu0 %v1289
        %1721 = vmatprep.subr.mxu0 0.0
        %1722 = vmatpush1.msra.mxu0 %v1290
        %1723 = vmatprep.subr.mxu0 0.0
        %1724 = vmatpush1.msra.mxu0 %v1291
        %1725 = vmatprep.subr.mxu0 0.0
        %1726 = vmatpush1.msra.mxu0 %v1292
        %1727 = vmatprep.subr.mxu0 0.0
        %1728 = vmatpush1.msra.mxu0 %v1293
        %1729 = vmatprep.subr.mxu0 0.0
        %1730 = vmatpush1.msra.mxu0 %v1294
        %1731 = vmatprep.mubr.f32.mxu0 %v1193
        %1732 = vmatmul.mubr.f32.gmra.mrb[0].mxu0 %v1096
        %v1733 = vpop.f32.mrb[0].mxu0
        %v1734 = vadd.f32 %v1664, %v1733
        %v1735 = vpop.f32.mrb[0].mxu0
        %1736 = vdwg.mxu0
        %1737 = vmatprep.subr.mxu0 0.0
        %1738 = vmatpush1.msra.mxu0 %v1295
        %1739 = vmatprep.subr.mxu0 0.0
        %1740 = vmatpush1.msra.mxu0 %v1296
        %1741 = vmatprep.subr.mxu0 0.0
        %1742 = vmatpush1.msra.mxu0 %v1297
        %1743 = vmatprep.subr.mxu0 0.0
        %1744 = vmatpush1.msra.mxu0 %v1298
        %1745 = vmatprep.subr.mxu0 0.0
        %1746 = vmatpush1.msra.mxu0 %v1299
        %1747 = vmatprep.subr.mxu0 0.0
        %1748 = vmatpush1.msra.mxu0 %v1300
        %1749 = vmatprep.subr.mxu0 0.0
        %1750 = vmatpush1.msra.mxu0 %v1301
        %1751 = vmatprep.subr.mxu0 0.0
        %1752 = vmatpush1.msra.mxu0 %v1302
        %1753 = vmatprep.subr.mxu0 0.0
        %1754 = vmatpush1.msra.mxu0 %v1303
        %1755 = vmatprep.subr.mxu0 0.0
        %1756 = vmatpush1.msra.mxu0 %v1304
        %1757 = vmatprep.subr.mxu0 0.0
        %1758 = vmatpush1.msra.mxu0 %v1305
        %1759 = vmatprep.subr.mxu0 0.0
        %1760 = vmatpush1.msra.mxu0 %v1306
        %1761 = vmatprep.subr.mxu0 0.0
        %1762 = vmatpush1.msra.mxu0 %v1307
        %1763 = vmatprep.subr.mxu0 0.0
        %1764 = vmatpush1.msra.mxu0 %v1308
        %1765 = vmatprep.subr.mxu0 0.0
        %1766 = vmatpush1.msra.mxu0 %v1309
        %1767 = vmatprep.subr.mxu0 0.0
        %1768 = vmatpush1.msra.mxu0 %v1310
        %1769 = vmatprep.subr.mxu0 0.0
        %1770 = vmatpush1.msra.mxu0 %v1311
        %1771 = vmatprep.subr.mxu0 0.0
        %1772 = vmatpush1.msra.mxu0 %v1312
        %1773 = vmatprep.subr.mxu0 0.0
        %1774 = vmatpush1.msra.mxu0 %v1313
        %1775 = vmatprep.subr.mxu0 0.0
        %1776 = vmatpush1.msra.mxu0 %v1314
        %1777 = vmatprep.subr.mxu0 0.0
        %1778 = vmatpush1.msra.mxu0 %v1315
        %1779 = vmatprep.subr.mxu0 0.0
        %1780 = vmatpush1.msra.mxu0 %v1316
        %1781 = vmatprep.subr.mxu0 0.0
        %1782 = vmatpush1.msra.mxu0 %v1317
        %1783 = vmatprep.subr.mxu0 0.0
        %1784 = vmatpush1.msra.mxu0 %v1318
        %1785 = vmatprep.subr.mxu0 0.0
        %1786 = vmatpush1.msra.mxu0 %v1319
        %1787 = vmatprep.subr.mxu0 0.0
        %1788 = vmatpush1.msra.mxu0 %v1320
        %1789 = vmatprep.subr.mxu0 0.0
        %1790 = vmatpush1.msra.mxu0 %v1321
        %1791 = vmatprep.subr.mxu0 0.0
        %1792 = vmatpush1.msra.mxu0 %v1322
        %1793 = vmatprep.subr.mxu0 0.0
        %1794 = vmatpush1.msra.mxu0 %v1323
        %1795 = vmatprep.subr.mxu0 0.0
        %1796 = vmatpush1.msra.mxu0 %v1324
        %1797 = vmatprep.subr.mxu0 0.0
        %1798 = vmatpush1.msra.mxu0 %v1325
        %1799 = vmatprep.subr.mxu0 0.0
        %1800 = vmatpush1.msra.mxu0 %v1326
        %1801 = vmatprep.mubr.f32.mxu0 %v1194
        %1802 = vmatmul.mubr.f32.gmra.mrb[0].mxu0 %v1111
        %v1803 = vpop.f32.mrb[0].mxu0
        %v1804 = vadd.f32 %v1734, %v1803
        %v1805 = vpop.f32.mrb[0].mxu0
        %1806 = vdwg.mxu0
        %1807 = vmatprep.subr.mxu0 0.0
        %1808 = vmatpush1.msra.mxu0 %v1327
        %1809 = vmatprep.subr.mxu0 0.0
        %1810 = vmatpush1.msra.mxu0 %v1328
        %1811 = vmatprep.subr.mxu0 0.0
        %1812 = vmatpush1.msra.mxu0 %v1329
        %1813 = vmatprep.subr.mxu0 0.0
        %1814 = vmatpush1.msra.mxu0 %v1330
        %1815 = vmatprep.subr.mxu0 0.0
        %1816 = vmatpush1.msra.mxu0 %v1331
        %1817 = vmatprep.subr.mxu0 0.0
        %1818 = vmatpush1.msra.mxu0 %v1332
        %1819 = vmatprep.subr.mxu0 0.0
        %1820 = vmatpush1.msra.mxu0 %v1333
        %1821 = vmatprep.subr.mxu0 0.0
        %1822 = vmatpush1.msra.mxu0 %v1334
        %1823 = vmatprep.subr.mxu0 0.0
        %1824 = vmatpush1.msra.mxu0 %v1335
        %1825 = vmatprep.subr.mxu0 0.0
        %1826 = vmatpush1.msra.mxu0 %v1336
        %1827 = vmatprep.subr.mxu0 0.0
        %1828 = vmatpush1.msra.mxu0 %v1337
        %1829 = vmatprep.subr.mxu0 0.0
        %1830 = vmatpush1.msra.mxu0 %v1338
        %1831 = vmatprep.subr.mxu0 0.0
        %1832 = vmatpush1.msra.mxu0 %v1339
        %1833 = vmatprep.subr.mxu0 0.0
        %1834 = vmatpush1.msra.mxu0 %v1340
        %1835 = vmatprep.subr.mxu0 0.0
        %1836 = vmatpush1.msra.mxu0 %v1341
        %1837 = vmatprep.subr.mxu0 0.0
        %1838 = vmatpush1.msra.mxu0 %v1342
        %1839 = vmatprep.subr.mxu0 0.0
        %1840 = vmatpush1.msra.mxu0 %v1343
        %1841 = vmatprep.subr.mxu0 0.0
        %1842 = vmatpush1.msra.mxu0 %v1344
        %1843 = vmatprep.subr.mxu0 0.0
        %1844 = vmatpush1.msra.mxu0 %v1345
        %1845 = vmatprep.subr.mxu0 0.0
        %1846 = vmatpush1.msra.mxu0 %v1346
        %1847 = vmatprep.subr.mxu0 0.0
        %1848 = vmatpush1.msra.mxu0 %v1347
        %1849 = vmatprep.subr.mxu0 0.0
        %1850 = vmatpush1.msra.mxu0 %v1348
        %1851 = vmatprep.subr.mxu0 0.0
        %1852 = vmatpush1.msra.mxu0 %v1349
        %1853 = vmatprep.subr.mxu0 0.0
        %1854 = vmatpush1.msra.mxu0 %v1350
        %1855 = vmatprep.subr.mxu0 0.0
        %1856 = vmatpush1.msra.mxu0 %v1351
        %1857 = vmatprep.subr.mxu0 0.0
        %1858 = vmatpush1.msra.mxu0 %v1352
        %1859 = vmatprep.subr.mxu0 0.0
        %1860 = vmatpush1.msra.mxu0 %v1353
        %1861 = vmatprep.subr.mxu0 0.0
        %1862 = vmatpush1.msra.mxu0 %v1354
        %1863 = vmatprep.subr.mxu0 0.0
        %1864 = vmatpush1.msra.mxu0 %v1355
        %1865 = vmatprep.subr.mxu0 0.0
        %1866 = vmatpush1.msra.mxu0 %v1356
        %1867 = vmatprep.subr.mxu0 0.0
        %1868 = vmatpush1.msra.mxu0 %v1357
        %1869 = vmatprep.subr.mxu0 0.0
        %1870 = vmatpush1.msra.mxu0 %v1358
        %1871 = vmatprep.mubr.f32.mxu0 %v1127
        %1872 = vmatmul.mubr.f32.gmra.mrb[0].mxu0 %v1126
        %v1873 = vpop.f32.mrb[0].mxu0
        %v1874 = vadd.f32 %v1804, %v1873
        %v1875 = vpop.f32.mrb[0].mxu0
        %1876 = vdwg.mxu0
        %1877 = vmatprep.subr.mxu0 0.0
        %1878 = vmatpush1.msra.mxu0 %v1359
        %1879 = vmatprep.subr.mxu0 0.0
        %1880 = vmatpush1.msra.mxu0 %v1360
        %1881 = vmatprep.subr.mxu0 0.0
        %1882 = vmatpush1.msra.mxu0 %v1361
        %1883 = vmatprep.subr.mxu0 0.0
        %1884 = vmatpush1.msra.mxu0 %v1362
        %1885 = vmatprep.subr.mxu0 0.0
        %1886 = vmatpush1.msra.mxu0 %v1363
        %1887 = vmatprep.subr.mxu0 0.0
        %1888 = vmatpush1.msra.mxu0 %v1364
        %1889 = vmatprep.subr.mxu0 0.0
        %1890 = vmatpush1.msra.mxu0 %v1365
        %1891 = vmatprep.subr.mxu0 0.0
        %1892 = vmatpush1.msra.mxu0 %v1366
        %1893 = vmatprep.subr.mxu0 0.0
        %1894 = vmatpush1.msra.mxu0 %v1367
        %1895 = vmatprep.subr.mxu0 0.0
        %1896 = vmatpush1.msra.mxu0 %v1368
        %1897 = vmatprep.subr.mxu0 0.0
        %1898 = vmatpush1.msra.mxu0 %v1369
        %1899 = vmatprep.subr.mxu0 0.0
        %1900 = vmatpush1.msra.mxu0 %v1370
        %1901 = vmatprep.subr.mxu0 0.0
        %1902 = vmatpush1.msra.mxu0 %v1371
        %1903 = vmatprep.subr.mxu0 0.0
        %1904 = vmatpush1.msra.mxu0 %v1372
        %1905 = vmatprep.subr.mxu0 0.0
        %1906 = vmatpush1.msra.mxu0 %v1373
        %1907 = vmatprep.subr.mxu0 0.0
        %1908 = vmatpush1.msra.mxu0 %v1374
        %1909 = vmatprep.subr.mxu0 0.0
        %1910 = vmatpush1.msra.mxu0 %v1375
        %1911 = vmatprep.subr.mxu0 0.0
        %1912 = vmatpush1.msra.mxu0 %v1376
        %1913 = vmatprep.subr.mxu0 0.0
        %1914 = vmatpush1.msra.mxu0 %v1377
        %1915 = vmatprep.subr.mxu0 0.0
        %1916 = vmatpush1.msra.mxu0 %v1378
        %1917 = vmatprep.subr.mxu0 0.0
        %1918 = vmatpush1.msra.mxu0 %v1379
        %1919 = vmatprep.subr.mxu0 0.0
        %1920 = vmatpush1.msra.mxu0 %v1380
        %1921 = vmatprep.subr.mxu0 0.0
        %1922 = vmatpush1.msra.mxu0 %v1381
        %1923 = vmatprep.subr.mxu0 0.0
        %1924 = vmatpush1.msra.mxu0 %v1382
        %1925 = vmatprep.subr.mxu0 0.0
        %1926 = vmatpush1.msra.mxu0 %v1383
        %1927 = vmatprep.subr.mxu0 0.0
        %1928 = vmatpush1.msra.mxu0 %v1384
        %1929 = vmatprep.subr.mxu0 0.0
        %1930 = vmatpush1.msra.mxu0 %v1385
        %1931 = vmatprep.subr.mxu0 0.0
        %1932 = vmatpush1.msra.mxu0 %v1386
        %1933 = vmatprep.subr.mxu0 0.0
        %1934 = vmatpush1.msra.mxu0 %v1387
        %1935 = vmatprep.subr.mxu0 0.0
        %1936 = vmatpush1.msra.mxu0 %v1388
        %1937 = vmatprep.subr.mxu0 0.0
        %1938 = vmatpush1.msra.mxu0 %v1389
        %1939 = vmatprep.subr.mxu0 0.0
        %1940 = vmatpush1.msra.mxu0 %v1390
        %1941 = vmatprep.mubr.f32.mxu0 %v1142
        %1942 = vmatmul.mubr.f32.gmra.mrb[0].mxu0 %v1195
        %v1943 = vpop.f32.mrb[0].mxu0
        %v1944 = vadd.f32 %v1874, %v1943
        %v1945 = vpop.f32.mrb[0].mxu0
        %1946 = vdwg.mxu0
        %1947 = vmatprep.subr.mxu0 0.0
        %1948 = vmatpush1.msra.mxu0 %v1391
        %1949 = vmatprep.subr.mxu0 0.0
        %1950 = vmatpush1.msra.mxu0 %v1392
        %1951 = vmatprep.subr.mxu0 0.0
        %1952 = vmatpush1.msra.mxu0 %v1393
        %1953 = vmatprep.subr.mxu0 0.0
        %1954 = vmatpush1.msra.mxu0 %v1394
        %1955 = vmatprep.subr.mxu0 0.0
        %1956 = vmatpush1.msra.mxu0 %v1395
        %1957 = vmatprep.subr.mxu0 0.0
        %1958 = vmatpush1.msra.mxu0 %v1396
        %1959 = vmatprep.subr.mxu0 0.0
        %1960 = vmatpush1.msra.mxu0 %v1397
        %1961 = vmatprep.subr.mxu0 0.0
        %1962 = vmatpush1.msra.mxu0 %v1398
        %1963 = vmatprep.subr.mxu0 0.0
        %1964 = vmatpush1.msra.mxu0 %v1399
        %1965 = vmatprep.subr.mxu0 0.0
        %1966 = vmatpush1.msra.mxu0 %v1400
        %1967 = vmatprep.subr.mxu0 0.0
        %1968 = vmatpush1.msra.mxu0 %v1401
        %1969 = vmatprep.subr.mxu0 0.0
        %1970 = vmatpush1.msra.mxu0 %v1402
        %1971 = vmatprep.subr.mxu0 0.0
        %1972 = vmatpush1.msra.mxu0 %v1403
        %1973 = vmatprep.subr.mxu0 0.0
        %1974 = vmatpush1.msra.mxu0 %v1404
        %1975 = vmatprep.subr.mxu0 0.0
        %1976 = vmatpush1.msra.mxu0 %v1405
        %1977 = vmatprep.subr.mxu0 0.0
        %1978 = vmatpush1.msra.mxu0 %v1406
        %1979 = vmatprep.subr.mxu0 0.0
        %1980 = vmatpush1.msra.mxu0 %v1407
        %1981 = vmatprep.subr.mxu0 0.0
        %1982 = vmatpush1.msra.mxu0 %v1408
        %1983 = vmatprep.subr.mxu0 0.0
        %1984 = vmatpush1.msra.mxu0 %v1409
        %1985 = vmatprep.subr.mxu0 0.0
        %1986 = vmatpush1.msra.mxu0 %v1410
        %1987 = vmatprep.subr.mxu0 0.0
        %1988 = vmatpush1.msra.mxu0 %v1411
        %1989 = vmatprep.subr.mxu0 0.0
        %1990 = vmatpush1.msra.mxu0 %v1412
        %1991 = vmatprep.subr.mxu0 0.0
        %1992 = vmatpush1.msra.mxu0 %v1413
        %1993 = vmatprep.subr.mxu0 0.0
        %1994 = vmatpush1.msra.mxu0 %v1414
        %1995 = vmatprep.subr.mxu0 0.0
        %1996 = vmatpush1.msra.mxu0 %v1415
        %1997 = vmatprep.subr.mxu0 0.0
        %1998 = vmatpush1.msra.mxu0 %v1416
        %1999 = vmatprep.subr.mxu0 0.0
        %2000 = vmatpush1.msra.mxu0 %v1417
        %2001 = vmatprep.subr.mxu0 0.0
        %2002 = vmatpush1.msra.mxu0 %v1418
        %2003 = vmatprep.subr.mxu0 0.0
        %2004 = vmatpush1.msra.mxu0 %v1419
        %2005 = vmatprep.subr.mxu0 0.0
        %2006 = vmatpush1.msra.mxu0 %v1420
        %2007 = vmatprep.subr.mxu0 0.0
        %2008 = vmatpush1.msra.mxu0 %v1421
        %2009 = vmatprep.subr.mxu0 0.0
        %2010 = vmatpush1.msra.mxu0 %v1422
        %2011 = vmatprep.mubr.f32.mxu0 %v1157
        %2012 = vmatmul.mubr.f32.gmra.mrb[0].mxu0 %v1196
        %v2013 = vpop.f32.mrb[0].mxu0
        %v2014 = vadd.f32 %v1944, %v2013
        %v2015 = vpop.f32.mrb[0].mxu0
        %2016 = vdwg.mxu0
        %2017 = vmatprep.subr.mxu0 0.0
        %2018 = vmatpush1.msra.mxu0 %v1423
        %2019 = vmatprep.subr.mxu0 0.0
        %2020 = vmatpush1.msra.mxu0 %v1424
        %2021 = vmatprep.subr.mxu0 0.0
        %2022 = vmatpush1.msra.mxu0 %v1425
        %2023 = vmatprep.subr.mxu0 0.0
        %2024 = vmatpush1.msra.mxu0 %v1426
        %2025 = vmatprep.subr.mxu0 0.0
        %2026 = vmatpush1.msra.mxu0 %v1427
        %2027 = vmatprep.subr.mxu0 0.0
        %2028 = vmatpush1.msra.mxu0 %v1428
        %2029 = vmatprep.subr.mxu0 0.0
        %2030 = vmatpush1.msra.mxu0 %v1429
        %2031 = vmatprep.subr.mxu0 0.0
        %2032 = vmatpush1.msra.mxu0 %v1430
        %2033 = vmatprep.subr.mxu0 0.0
        %2034 = vmatpush1.msra.mxu0 %v1431
        %2035 = vmatprep.subr.mxu0 0.0
        %2036 = vmatpush1.msra.mxu0 %v1432
        %2037 = vmatprep.subr.mxu0 0.0
        %2038 = vmatpush1.msra.mxu0 %v1433
        %2039 = vmatprep.subr.mxu0 0.0
        %2040 = vmatpush1.msra.mxu0 %v1434
        %2041 = vmatprep.subr.mxu0 0.0
        %2042 = vmatpush1.msra.mxu0 %v1435
        %2043 = vmatprep.subr.mxu0 0.0
        %2044 = vmatpush1.msra.mxu0 %v1436
        %2045 = vmatprep.subr.mxu0 0.0
        %2046 = vmatpush1.msra.mxu0 %v1437
        %2047 = vmatprep.subr.mxu0 0.0
        %2048 = vmatpush1.msra.mxu0 %v1438
        %2049 = vmatprep.subr.mxu0 0.0
        %2050 = vmatpush1.msra.mxu0 %v1439
        %2051 = vmatprep.subr.mxu0 0.0
        %2052 = vmatpush1.msra.mxu0 %v1440
        %2053 = vmatprep.subr.mxu0 0.0
        %2054 = vmatpush1.msra.mxu0 %v1441
        %2055 = vmatprep.subr.mxu0 0.0
        %2056 = vmatpush1.msra.mxu0 %v1442
        %2057 = vmatprep.subr.mxu0 0.0
        %2058 = vmatpush1.msra.mxu0 %v1443
        %2059 = vmatprep.subr.mxu0 0.0
        %2060 = vmatpush1.msra.mxu0 %v1444
        %2061 = vmatprep.subr.mxu0 0.0
        %2062 = vmatpush1.msra.mxu0 %v1445
        %2063 = vmatprep.subr.mxu0 0.0
        %2064 = vmatpush1.msra.mxu0 %v1446
        %2065 = vmatprep.subr.mxu0 0.0
        %2066 = vmatpush1.msra.mxu0 %v1447
        %2067 = vmatprep.subr.mxu0 0.0
        %2068 = vmatpush1.msra.mxu0 %v1448
        %2069 = vmatprep.subr.mxu0 0.0
        %2070 = vmatpush1.msra.mxu0 %v1449
        %2071 = vmatprep.subr.mxu0 0.0
        %2072 = vmatpush1.msra.mxu0 %v1450
        %2073 = vmatprep.subr.mxu0 0.0
        %2074 = vmatpush1.msra.mxu0 %v1451
        %2075 = vmatprep.subr.mxu0 0.0
        %2076 = vmatpush1.msra.mxu0 %v1452
        %2077 = vmatprep.subr.mxu0 0.0
        %2078 = vmatpush1.msra.mxu0 %v1453
        %2079 = vmatprep.subr.mxu0 0.0
        %2080 = vmatpush1.msra.mxu0 %v1454
        %2081 = vmatprep.mubr.f32.mxu0 %v1197
        %2082 = vmatmul.mubr.f32.gmra.mrb[0].mxu0 %v1158
        %v2083 = vpop.f32.mrb[0].mxu0
        %v2084 = vadd.f32 %v2014, %v2083
        %v2085 = vpop.f32.mrb[0].mxu0
        %2086 = vdwg.mxu0
        %2087 = vmatprep.subr.mxu0 0.0
        %2088 = vmatpush1.msra.mxu0 %v1455
        %2089 = vmatprep.subr.mxu0 0.0
        %2090 = vmatpush1.msra.mxu0 %v1456
        %2091 = vmatprep.subr.mxu0 0.0
        %2092 = vmatpush1.msra.mxu0 %v1457
        %2093 = vmatprep.subr.mxu0 0.0
        %2094 = vmatpush1.msra.mxu0 %v1458
        %2095 = vmatprep.subr.mxu0 0.0
        %2096 = vmatpush1.msra.mxu0 %v1459
        %2097 = vmatprep.subr.mxu0 0.0
        %2098 = vmatpush1.msra.mxu0 %v1460
        %2099 = vmatprep.subr.mxu0 0.0
        %2100 = vmatpush1.msra.mxu0 %v1461
        %2101 = vmatprep.subr.mxu0 0.0
        %2102 = vmatpush1.msra.mxu0 %v1462
        %2103 = vmatprep.subr.mxu0 0.0
        %2104 = vmatpush1.msra.mxu0 %v1463
        %2105 = vmatprep.subr.mxu0 0.0
        %2106 = vmatpush1.msra.mxu0 %v1464
        %2107 = vmatprep.subr.mxu0 0.0
        %2108 = vmatpush1.msra.mxu0 %v1465
        %2109 = vmatprep.subr.mxu0 0.0
        %2110 = vmatpush1.msra.mxu0 %v1466
        %2111 = vmatprep.subr.mxu0 0.0
        %2112 = vmatpush1.msra.mxu0 %v1467
        %2113 = vmatprep.subr.mxu0 0.0
        %2114 = vmatpush1.msra.mxu0 %v1468
        %2115 = vmatprep.subr.mxu0 0.0
        %2116 = vmatpush1.msra.mxu0 %v1469
        %2117 = vmatprep.subr.mxu0 0.0
        %2118 = vmatpush1.msra.mxu0 %v1470
        %2119 = vmatprep.subr.mxu0 0.0
        %2120 = vmatpush1.msra.mxu0 %v1471
        %2121 = vmatprep.subr.mxu0 0.0
        %2122 = vmatpush1.msra.mxu0 %v1472
        %2123 = vmatprep.subr.mxu0 0.0
        %2124 = vmatpush1.msra.mxu0 %v1473
        %2125 = vmatprep.subr.mxu0 0.0
        %2126 = vmatpush1.msra.mxu0 %v1474
        %2127 = vmatprep.subr.mxu0 0.0
        %2128 = vmatpush1.msra.mxu0 %v1475
        %2129 = vmatprep.subr.mxu0 0.0
        %2130 = vmatpush1.msra.mxu0 %v1476
        %2131 = vmatprep.subr.mxu0 0.0
        %2132 = vmatpush1.msra.mxu0 %v1477
        %2133 = vmatprep.subr.mxu0 0.0
        %2134 = vmatpush1.msra.mxu0 %v1478
        %2135 = vmatprep.subr.mxu0 0.0
        %2136 = vmatpush1.msra.mxu0 %v1479
        %2137 = vmatprep.subr.mxu0 0.0
        %2138 = vmatpush1.msra.mxu0 %v1480
        %2139 = vmatprep.subr.mxu0 0.0
        %2140 = vmatpush1.msra.mxu0 %v1481
        %2141 = vmatprep.subr.mxu0 0.0
        %2142 = vmatpush1.msra.mxu0 %v1482
        %2143 = vmatprep.subr.mxu0 0.0
        %2144 = vmatpush1.msra.mxu0 %v1483
        %2145 = vmatprep.subr.mxu0 0.0
        %2146 = vmatpush1.msra.mxu0 %v1484
        %2147 = vmatprep.subr.mxu0 0.0
        %2148 = vmatpush1.msra.mxu0 %v1485
        %2149 = vmatprep.subr.mxu0 0.0
        %2150 = vmatpush1.msra.mxu0 %v1486
        %2151 = vmatprep.mubr.f32.mxu0 %v1198
        %2152 = vmatmul.mubr.f32.gmra.mrb[0].mxu0 %v1173
        %v2153 = vpop.f32.mrb[0].mxu0
        %v2154 = vadd.f32 %v2084, %v2153
        %v2155 = vpop.f32.mrb[0].mxu0
        %2156 = vdwg.mxu0
        %2157 = vmatprep.subr.mxu0 0.0
        %2158 = vmatpush1.msra.mxu0 %v1487
        %2159 = vmatprep.subr.mxu0 0.0
        %2160 = vmatpush1.msra.mxu0 %v1488
        %2161 = vmatprep.subr.mxu0 0.0
        %2162 = vmatpush1.msra.mxu0 %v1489
        %2163 = vmatprep.subr.mxu0 0.0
        %2164 = vmatpush1.msra.mxu0 %v1490
        %2165 = vmatprep.subr.mxu0 0.0
        %2166 = vmatpush1.msra.mxu0 %v1491
        %2167 = vmatprep.subr.mxu0 0.0
        %2168 = vmatpush1.msra.mxu0 %v1492
        %2169 = vmatprep.subr.mxu0 0.0
        %2170 = vmatpush1.msra.mxu0 %v1493
        %2171 = vmatprep.subr.mxu0 0.0
        %2172 = vmatpush1.msra.mxu0 %v1494
        %2173 = vmatprep.subr.mxu0 0.0
        %2174 = vmatpush1.msra.mxu0 %v1495
        %2175 = vmatprep.subr.mxu0 0.0
        %2176 = vmatpush1.msra.mxu0 %v1496
        %2177 = vmatprep.subr.mxu0 0.0
        %2178 = vmatpush1.msra.mxu0 %v1497
        %2179 = vmatprep.subr.mxu0 0.0
        %2180 = vmatpush1.msra.mxu0 %v1498
        %2181 = vmatprep.subr.mxu0 0.0
        %2182 = vmatpush1.msra.mxu0 %v1499
        %2183 = vmatprep.subr.mxu0 0.0
        %2184 = vmatpush1.msra.mxu0 %v1500
        %2185 = vmatprep.subr.mxu0 0.0
        %2186 = vmatpush1.msra.mxu0 %v1501
        %2187 = vmatprep.subr.mxu0 0.0
        %2188 = vmatpush1.msra.mxu0 %v1502
        %2189 = vmatprep.subr.mxu0 0.0
        %2190 = vmatpush1.msra.mxu0 %v1503
        %2191 = vmatprep.subr.mxu0 0.0
        %2192 = vmatpush1.msra.mxu0 %v1504
        %2193 = vmatprep.subr.mxu0 0.0
        %2194 = vmatpush1.msra.mxu0 %v1505
        %2195 = vmatprep.subr.mxu0 0.0
        %2196 = vmatpush1.msra.mxu0 %v1506
        %2197 = vmatprep.subr.mxu0 0.0
        %2198 = vmatpush1.msra.mxu0 %v1507
        %2199 = vmatprep.subr.mxu0 0.0
        %2200 = vmatpush1.msra.mxu0 %v1508
        %2201 = vmatprep.subr.mxu0 0.0
        %2202 = vmatpush1.msra.mxu0 %v1509
        %2203 = vmatprep.subr.mxu0 0.0
        %2204 = vmatpush1.msra.mxu0 %v1510
        %2205 = vmatprep.subr.mxu0 0.0
        %2206 = vmatpush1.msra.mxu0 %v1511
        %2207 = vmatprep.subr.mxu0 0.0
        %2208 = vmatpush1.msra.mxu0 %v1512
        %2209 = vmatprep.subr.mxu0 0.0
        %2210 = vmatpush1.msra.mxu0 %v1513
        %2211 = vmatprep.subr.mxu0 0.0
        %2212 = vmatpush1.msra.mxu0 %v1514
        %2213 = vmatprep.subr.mxu0 0.0
        %2214 = vmatpush1.msra.mxu0 %v1515
        %2215 = vmatprep.subr.mxu0 0.0
        %2216 = vmatpush1.msra.mxu0 %v1516
        %2217 = vmatprep.subr.mxu0 0.0
        %2218 = vmatpush1.msra.mxu0 %v1517
        %2219 = vmatprep.subr.mxu0 0.0
        %2220 = vmatpush1.msra.mxu0 %v1518
        %2221 = vmatprep.mubr.f32.mxu0 %v1188
        %2222 = vmatmul.mubr.f32.gmra.mrb[0].mxu0 %v1187
        %v2223 = vpop.f32.mrb[0].mxu0
        %v2224 = vadd.f32 %v2154, %v2223
        %v2225 = vpop.f32.mrb[0].mxu0
        %2226 = vdwg.mxu0
        %2227 = vmatprep.subr.mxu0 0.0
        %2228 = vmatpush1.msra.mxu0 %v1519
        %2229 = vmatprep.subr.mxu0 0.0
        %2230 = vmatpush1.msra.mxu0 %v1520
        %2231 = vmatprep.subr.mxu0 0.0
        %2232 = vmatpush1.msra.mxu0 %v1521
        %2233 = vmatprep.subr.mxu0 0.0
        %2234 = vmatpush1.msra.mxu0 %v1522
        %2235 = vmatprep.subr.mxu0 0.0
        %2236 = vmatpush1.msra.mxu0 0.0
        %2237 = vmatprep.subr.mxu0 0.0
        %2238 = vmatpush1.msra.mxu0 0.0
        %2239 = vmatprep.subr.mxu0 0.0
        %2240 = vmatpush1.msra.mxu0 0.0
        %2241 = vmatprep.subr.mxu0 0.0
        %2242 = vmatpush1.msra.mxu0 0.0
        %2243 = vmatprep.subr.mxu0 0.0
        %2244 = vmatpush1.msra.mxu0 0.0
        %2245 = vmatprep.subr.mxu0 0.0
        %2246 = vmatpush1.msra.mxu0 0.0
        %2247 = vmatprep.subr.mxu0 0.0
        %2248 = vmatpush1.msra.mxu0 0.0
        %2249 = vmatprep.subr.mxu0 0.0
        %2250 = vmatpush1.msra.mxu0 0.0
        %2251 = vmatprep.subr.mxu0 0.0
        %2252 = vmatpush1.msra.mxu0 0.0
        %2253 = vmatprep.subr.mxu0 0.0
        %2254 = vmatpush1.msra.mxu0 0.0
        %2255 = vmatprep.subr.mxu0 0.0
        %2256 = vmatpush1.msra.mxu0 0.0
        %2257 = vmatprep.subr.mxu0 0.0
        %2258 = vmatpush1.msra.mxu0 0.0
        %2259 = vmatprep.subr.mxu0 0.0
        %2260 = vmatpush1.msra.mxu0 0.0
        %2261 = vmatprep.subr.mxu0 0.0
        %2262 = vmatpush1.msra.mxu0 0.0
        %2263 = vmatprep.subr.mxu0 0.0
        %2264 = vmatpush1.msra.mxu0 0.0
        %2265 = vmatprep.subr.mxu0 0.0
        %2266 = vmatpush1.msra.mxu0 0.0
        %2267 = vmatprep.subr.mxu0 0.0
        %2268 = vmatpush1.msra.mxu0 0.0
        %2269 = vmatprep.subr.mxu0 0.0
        %2270 = vmatpush1.msra.mxu0 0.0
        %2271 = vmatprep.subr.mxu0 0.0
        %2272 = vmatpush1.msra.mxu0 0.0
        %2273 = vmatprep.subr.mxu0 0.0
        %2274 = vmatpush1.msra.mxu0 0.0
        %2275 = vmatprep.subr.mxu0 0.0
        %2276 = vmatpush1.msra.mxu0 0.0
        %2277 = vmatprep.subr.mxu0 0.0
        %2278 = vmatpush1.msra.mxu0 0.0
        %2279 = vmatprep.subr.mxu0 0.0
        %2280 = vmatpush1.msra.mxu0 0.0
        %2281 = vmatprep.subr.mxu0 0.0
        %2282 = vmatpush1.msra.mxu0 0.0
        %2283 = vmatprep.subr.mxu0 0.0
        %2284 = vmatpush1.msra.mxu0 0.0
        %2285 = vmatprep.subr.mxu0 0.0
        %2286 = vmatpush1.msra.mxu0 0.0
        %2287 = vmatprep.subr.mxu0 0.0
        %2288 = vmatpush1.msra.mxu0 0.0
        %2289 = vmatprep.subr.mxu0 0.0
        %2290 = vmatpush1.msra.mxu0 0.0
        %2291 = vmatprep.mubr.f32.mxu0 0.0
        %2292 = vmatmul.mubr.f32.gmra.mrb[0].mxu0 %v1525
        %v2293 = vpop.f32.mrb[0].mxu0
        %v2294 = vadd.f32 %v2224, %v2293
        %v2295 = vpop.f32.mrb[0].mxu0
        %2296 = vdwg.mxu0
        %v2297 = vmax.f32 %v2294, 0.0
        %v2298 = vld [vmem:[#allocation14] sm:$0xff]
        %v2299 = vld [vmem:[#allocation14 + $0x8] sm:$0xff]
        %v2300 = vld [vmem:[#allocation14 + $0x10] sm:$0xff]
        %v2301 = vld [vmem:[#allocation14 + $0x18] sm:$0xff]
        %v2302 = vld [vmem:[#allocation16] sm:$0x1]
        %v2304 = vsel %vm1524, %v2297, 0
        %2306 = vmatprep.subr.mxu0 0.0
        %2307 = vmatpush1.msra.mxu0 %v2298
        %2308 = vmatprep.subr.mxu0 0.0
        %2309 = vmatpush1.msra.mxu0 %v2299
        %2310 = vmatprep.subr.mxu0 0.0
        %2311 = vmatpush1.msra.mxu0 %v2300
        %2312 = vmatprep.subr.mxu0 0.0
        %2313 = vmatpush1.msra.mxu0 %v2301
        %2314 = vmatprep.subr.mxu0 0.0
        %2315 = vmatpush1.msra.mxu0 0.0
        %2316 = vmatprep.subr.mxu0 0.0
        %2317 = vmatpush1.msra.mxu0 0.0
        %2318 = vmatprep.subr.mxu0 0.0
        %2319 = vmatpush1.msra.mxu0 0.0
        %2320 = vmatprep.subr.mxu0 0.0
        %2321 = vmatpush1.msra.mxu0 0.0
        %2322 = vmatprep.subr.mxu0 0.0
        %2323 = vmatpush1.msra.mxu0 0.0
        %2324 = vmatprep.subr.mxu0 0.0
        %2325 = vmatpush1.msra.mxu0 0.0
        %2326 = vmatprep.subr.mxu0 0.0
        %2327 = vmatpush1.msra.mxu0 0.0
        %2328 = vmatprep.subr.mxu0 0.0
        %2329 = vmatpush1.msra.mxu0 0.0
        %2330 = vmatprep.subr.mxu0 0.0
        %2331 = vmatpush1.msra.mxu0 0.0
        %2332 = vmatprep.subr.mxu0 0.0
        %2333 = vmatpush1.msra.mxu0 0.0
        %2334 = vmatprep.subr.mxu0 0.0
        %2335 = vmatpush1.msra.mxu0 0.0
        %2336 = vmatprep.subr.mxu0 0.0
        %2337 = vmatpush1.msra.mxu0 0.0
        %2338 = vmatprep.subr.mxu0 0.0
        %2339 = vmatpush1.msra.mxu0 0.0
        %2340 = vmatprep.subr.mxu0 0.0
        %2341 = vmatpush1.msra.mxu0 0.0
        %2342 = vmatprep.subr.mxu0 0.0
        %2343 = vmatpush1.msra.mxu0 0.0
        %2344 = vmatprep.subr.mxu0 0.0
        %2345 = vmatpush1.msra.mxu0 0.0
        %2346 = vmatprep.subr.mxu0 0.0
        %2347 = vmatpush1.msra.mxu0 0.0
        %2348 = vmatprep.subr.mxu0 0.0
        %2349 = vmatpush1.msra.mxu0 0.0
        %2350 = vmatprep.subr.mxu0 0.0
        %2351 = vmatpush1.msra.mxu0 0.0
        %2352 = vmatprep.subr.mxu0 0.0
        %2353 = vmatpush1.msra.mxu0 0.0
        %2354 = vmatprep.subr.mxu0 0.0
        %2355 = vmatpush1.msra.mxu0 0.0
        %2356 = vmatprep.subr.mxu0 0.0
        %2357 = vmatpush1.msra.mxu0 0.0
        %2358 = vmatprep.subr.mxu0 0.0
        %2359 = vmatpush1.msra.mxu0 0.0
        %2360 = vmatprep.subr.mxu0 0.0
        %2361 = vmatpush1.msra.mxu0 0.0
        %2362 = vmatprep.subr.mxu0 0.0
        %2363 = vmatpush1.msra.mxu0 0.0
        %2364 = vmatprep.subr.mxu0 0.0
        %2365 = vmatpush1.msra.mxu0 0.0
        %2366 = vmatprep.subr.mxu0 0.0
        %2367 = vmatpush1.msra.mxu0 0.0
        %2368 = vmatprep.subr.mxu0 0.0
        %2369 = vmatpush1.msra.mxu0 0.0
        %2370 = vmatprep.mubr.f32.mxu0 0.0
        %2371 = vmatmul.mubr.f32.gmra.mrb[0].mxu0 %v2304
        %v2372 = vpop.f32.mrb[0].mxu0
        %v2373 = vadd.f32 %v2302, %v2372
        %v2374 = vpop.f32.mrb[0].mxu0
        %2375 = vdwg.mxu0
        %vm2376 = vcmask 73728
        %2377 = vst.msk [vmem:[%s468] sm:$0x1] %vm2376, %v2373
        %s2378 = sand.u32 %s252, 1
        %s2379 = scalar_lea.sflag [#allocation4], %s2378
        %s2380 = sand.u32 %s252, 1
        %s2381 = scalar_lea.vmem [#allocation17], %s2380
        // Predicated region
        $region97: #{forward.1} parent=59 // pred_check
          %p2382 = pneg %p262
        $region98: #{forward.1} parent=59 // pred_check_branch
          %2384 = sbr.rel (%p2382) target = $region100
        $region99: #{forward.1} parent=59 // pred_region
          %s2386 = ssub.s32 16, 16
          %2387 = vsyncadd %s2379, %s2386
          %s2388 = smul.addr %s29, 16
          %s2389 = scalar_lea.hbm %s10, %s2388
          %s2391 = sshll.u32 %s2381, 4
          %s2392 = int_to_ptr.vmem [resolvable:$true] %s2391
          %2394 = dma.vmem_to_hbm [thread:$0]  %s2392, 16, %s2389, %s2379
        $region100: #{forward.1} parent=59 // pred_fallthru
          _
      $region60: #{forward.1} parent=5 // pred_fallthru
        _
      %p2395 = scmp.le.s32.totalorder 2, %s24
      // Predicated region
      $region101: #{forward.1} parent=5 // pred_check
        %p2396 = pneg %p2395
      $region102: #{forward.1} parent=5 // pred_check_branch
        %2398 = sbr.rel (%p2396) target = $region104
      $region103: #{forward.1} parent=5 // pred_region
        %s2399 = ssub.s32 %s24, 2
        // Predicated region
        $region105: #{forward.1} parent=103 // pred_check
          %p2400 = pneg %p268
        $region106: #{forward.1} parent=103 // pred_check_branch
          %2402 = sbr.rel (%p2400) target = $region108
        $region107: #{forward.1} parent=103 // pred_region
          %s2403 = sand.u32 %s253, 1
          %s2404 = scalar_lea.sflag [#allocation4], %s2403
          %s2405 = sand.u32 %s253, 1
          %s2406 = scalar_lea.vmem [#allocation17], %s2405
          %2407 = dma.done %s2404, 16
        $region108: #{forward.1} parent=103 // pred_fallthru
          _
      $region104: #{forward.1} parent=5 // pred_fallthru
        _
    $region6: #{forward.1} parent=1 // loop_footer
      %s28 = sadd.s32 1, %s24
    $region7: #{forward.1} parent=1 // loop_footer_branch
      %23 = sbr.rel target = $region3
    $region8: #{forward.1} parent=1 // loop_exit
      _
    %2408 = vsyncpa [#allocation3], 1
    %s2409 = scalar_lea.sflag [#allocation3], 1
    %2410 = vsyncpa %s2409, 1
    %2411 = vsyncpa [#allocation6], 1
    %2412 = vsyncpa [#allocation9], 1
    %2413 = vsyncpa [#allocation12], 1
    %2414 = vsyncpa [#allocation15], 1
    %2415 = vsyncpa [#allocation4], 1
    %s2416 = scalar_lea.sflag [#allocation4], 1
    %2417 = vsyncpa %s2416, 1

</llo_original>
